<compile_context>
chip_gen: v7x
topology: tpu7x:2x2x1
jax: 0.10.0
libtpu: 0.0.40
codegen_flags: <defaults>
</compile_context>

<pallas_src>
import functools

import jax
import jax.numpy as jnp
from jax.experimental import pallas as pl
from jax.experimental.pallas import tpu as pltpu


def _round_up(v, m):
    return ((v + m - 1) // m) * m


def _lenia_kernel(x_ref, bands_ref, out_ref, xw_ref, *, K, H, W, pad, Bt, WL):
    """One batch tile per grid step.

    x_ref     : VMEM (Bt, H, W)   unpadded state tile
    bands_ref : VMEM (K, WL, WL)  banded column-offset matrices (grid-invariant)
    out_ref   : VMEM (Bt, H, WL)  lane-dense new state (columns >= W are don't-care)
    xw_ref    : VMEM (R, WL)      flat working buffer:
                  rows [b*Hp, b*Hp + 2*pad)          : zero halo (b = 0..Bt)
                  rows [b*Hp + 2*pad, b*Hp + 2*pad+H): state of batch element b
    """
    Hp = H + 2 * pad
    M = Bt * Hp                # potential rows computed per step (incl. junk halo rows)
    R = M + 2 * pad            # working-buffer rows

    # ---- init: zero halos (and stale lane tail), drop the state into the interiors ----
    for b in range(Bt + 1):
        xw_ref[b * Hp:b * Hp + 2 * pad, :] = jnp.zeros((2 * pad, WL), jnp.float32)
    if WL > W:                 # keep stale garbage / NaNs out of the MXU + epilogue reads
        xw_ref[:, W:] = jnp.zeros((R, WL - W), jnp.float32)
    for b in range(Bt):
        xw_ref[b * Hp + 2 * pad:b * Hp + 2 * pad + H, :W] = x_ref[b]

    # ---- K banded MXU matmuls; contiguous stride-1 row views; single accumulator ----
    # potential[r, x] = sum_i xw[r + i, :] @ bands[i][:, x]
    acc = jnp.zeros((M, WL), jnp.float32)
    for i in range(K):
        acc = acc + jnp.dot(xw_ref[i:i + M, :], bands_ref[i],
                            preferred_element_type=jnp.float32)

    # ---- growth + Euler update + clamp epilogue (EUP exp hides under the matmuls) ----
    state = xw_ref[pad:pad + M, :]                     # state row aligned with acc row
    growth = jnp.exp(-10.0 * (acc - 0.5) ** 2)         # == exp(-(p - 0.5)^2 / 0.1)
    new_state = jnp.clip(state + 0.1 * (growth - 0.5), 0.0, 1.0)

    for b in range(Bt):                                # store only the real image rows
        out_ref[b] = new_state[b * Hp + pad:b * Hp + pad + H, :]


def build_lenia_bands(growth_kernel, W, WL):
    """Precompute the (K, WL, WL) banded column-offset matrices.

    bands[i, c, x] = k[i, c - x + pad] when (c - x + pad) in [0, K), c < W and x < W,
    else 0.  They fold all K column taps and the 'same' zero padding along W into one
    MXU operand per kernel row; source columns >= W are masked so stale lane-tail data
    can never leak into kept outputs.  For iterative Lenia stepping, call this once and
    pass the result to lenia_forward(bands=...).
    """
    K = growth_kernel.shape[-1]
    pad = K // 2
    k2d = growth_kernel.reshape(K, K).astype(jnp.float32)
    c_idx = jnp.arange(WL)[:, None]                    # source column in working buffer
    x_idx = jnp.arange(WL)[None, :]                    # output column
    jj = c_idx - x_idx + pad
    valid = (jj >= 0) & (jj < K) & (x_idx < W) & (c_idx < W)
    return jnp.where(valid[None], k2d[:, jnp.clip(jj, 0, K - 1)], 0.0)


def _pick_batch_tile(B, Hp, row_budget=512):
    bt = max(1, min(B, row_budget // max(Hp, 1)))
    if B >= 2:
        bt = min(bt, B // 2)   # keep >= 2 grid steps so both v7x TensorCores get work
    bt = max(bt, 1)
    while B % bt:
        bt -= 1
    return bt


def lenia_forward(state, growth_kernel, *, bands=None, batch_tile=None):
    """state: (B, 1, H, W) f32; growth_kernel: (1, 1, K, K) f32 -> (B, 1, H, W) f32."""
    B, C, H, W = state.shape
    assert C == 1, "conv weight (C,1,K,K) with groups=1 requires in_channels == 1"
    K = growth_kernel.shape[-1]
    pad = K // 2
    Hp = H + 2 * pad
    WL = max(128, _round_up(W, 128))                   # lane-dense working/output width

    Bt = _pick_batch_tile(B, Hp) if batch_tile is None else batch_tile
    assert B % Bt == 0
    nb = B // Bt
    R = Bt * Hp + 2 * pad

    x = state[:, 0, :, :].astype(jnp.float32)          # (B, H, W); no host-side spatial pad
    if bands is None:
        bands = build_lenia_bands(growth_kernel, W, WL)

    kernel = functools.partial(_lenia_kernel, K=K, H=H, W=W, pad=pad, Bt=Bt, WL=WL)

    # Explicit scoped-VMEM budget (matters on v5e's 16 MiB default when tiles grow).
    blk_bytes = 4 * (2 * Bt * H * W + 2 * Bt * H * WL + 2 * K * WL * WL + R * WL)
    vmem_limit = int(min(128 << 20, max(32 << 20, 2 * blk_bytes)))

    out = pl.pallas_call(
        kernel,
        out_shape=jax.ShapeDtypeStruct((B, H, WL), jnp.float32),
        grid=(nb,),
        in_specs=[
            pl.BlockSpec((Bt, H, W), lambda b: (b, 0, 0)),
            pl.BlockSpec(memory_space=pltpu.MemorySpace.VMEM),   # whole bands resident
        ],
        out_specs=pl.BlockSpec((Bt, H, WL), lambda b: (b, 0, 0)),
        scratch_shapes=[pltpu.VMEM((R, WL), jnp.float32)],
        compiler_params=pltpu.CompilerParams(
            dimension_semantics=("parallel",),
            vmem_limit_bytes=vmem_limit),
    )(x, bands)

    return out[:, :, :W][:, None, :, :]                # drop lane pad, back to NCHW


def lenia_reference(state, growth_kernel):
    """Pure-JAX reference mirroring the PyTorch forward (for verification)."""
    K = growth_kernel.shape[-1]
    potential = jax.lax.conv_general_dilated(
        state, growth_kernel,
        window_strides=(1, 1),
        padding=[(K // 2, K // 2), (K // 2, K // 2)],
        dimension_numbers=("NCHW", "OIHW", "NCHW"),
        precision=jax.lax.Precision.HIGHEST,
    )
    growth = jnp.exp(-((potential - 0.5) ** 2) / 0.1)
    new_state = state + 0.1 * (growth - 0.5)
    return jnp.clip(new_state, 0.0, 1.0)


if __name__ == "__main__":
    channels = 1
    kernel_size = 13
    B, H, W = 2, 16, 16

    key = jax.random.PRNGKey(0)
    k_key, s_key = jax.random.split(key)

    # torch.randn-style init for the parameter; state in [0, 1] like a Lenia field.
    growth_kernel = jax.random.normal(
        k_key, (channels, 1, kernel_size, kernel_size), dtype=jnp.float32)
    state = jax.random.uniform(s_key, (B, channels, H, W), dtype=jnp.float32)

    out = jax.block_until_ready(lenia_forward(state, growth_kernel))
    ref = jax.block_until_ready(lenia_reference(state, growth_kernel))

    assert out.shape == (B, channels, H, W)
    # Tolerance deliberately re-baselined: the kernel matmuls run at default TPU
    # precision (single bf16 pass on the MXU), while the reference conv runs at HIGHEST.
    assert jnp.allclose(out, ref, rtol=0.0, atol=4e-2), "mismatch vs reference"

    print("KERNEL_OK")
</pallas_src>

<mosaic_0001>
module attributes {stable_mosaic.version = 11 : i64} {
  func.func @_lenia_kernel(%arg0: i32, %arg1: memref<1x16x16xf32, #tpu.memory_space<vmem>>, %arg2: memref<13x128x128xf32, #tpu.memory_space<vmem>>, %arg3: memref<1x16x128xf32, #tpu.memory_space<vmem>>, %arg4: memref<40x128xf32, #tpu.memory_space<vmem>>) attributes {dimension_semantics = [#tpu.dimension_semantics<parallel>], iteration_bounds = array<i64: 2>, scalar_prefetch = 0 : i64, scratch_operands = 1 : i64, tpu.core_type = #tpu.core_type<tc>, window_params = [{transform_indices = @transform_0, window_bounds = array<i64: 1, 16, 16>}, {pipeline_mode = #tpu.pipeline_mode<synchronous>, transform_indices = @transform_1, window_bounds = array<i64: 13, 128, 128>}, {transform_indices = @transform_2, window_bounds = array<i64: 1, 16, 128>}]} {
    %cst = arith.constant 0.000000e+00 : f32
    %0 = vector.broadcast %cst : f32 to vector<12x128xf32>
    %c0 = arith.constant 0 : index
    %c0_0 = arith.constant 0 : index
    %1 = vector.load %arg4[%c0, %c0_0] : memref<40x128xf32, #tpu.memory_space<vmem>>, vector<12x128xf32>
    tpu.vector_store %arg4[%c0, %c0_0], %0 {strides = array<i32>} : memref<40x128xf32, #tpu.memory_space<vmem>>, vector<12x128xf32>,
    %cst_1 = arith.constant 0.000000e+00 : f32
    %2 = vector.broadcast %cst_1 : f32 to vector<12x128xf32>
    %c28 = arith.constant 28 : index
    %c0_2 = arith.constant 0 : index
    %3 = vector.load %arg4[%c28, %c0_2] : memref<40x128xf32, #tpu.memory_space<vmem>>, vector<12x128xf32>
    tpu.vector_store %arg4[%c28, %c0_2], %2 {strides = array<i32>} : memref<40x128xf32, #tpu.memory_space<vmem>>, vector<12x128xf32>,
    %cst_3 = arith.constant 0.000000e+00 : f32
    %4 = vector.broadcast %cst_3 : f32 to vector<40x112xf32>
    %c0_4 = arith.constant 0 : index
    %c16 = arith.constant 16 : index
    %5 = vector.load %arg4[%c0_4, %c16] : memref<40x128xf32, #tpu.memory_space<vmem>>, vector<40x112xf32>
    tpu.vector_store %arg4[%c0_4, %c16], %4 {strides = array<i32>} : memref<40x128xf32, #tpu.memory_space<vmem>>, vector<40x112xf32>,
    %c0_5 = arith.constant 0 : index
    %c0_6 = arith.constant 0 : index
    %c0_7 = arith.constant 0 : index
    %6 = vector.load %arg1[%c0_5, %c0_6, %c0_7] : memref<1x16x16xf32, #tpu.memory_space<vmem>>, vector<1x16x16xf32>
    %7 = vector.shape_cast %6 : vector<1x16x16xf32> to vector<16x16xf32>
    %c12 = arith.constant 12 : index
    %c0_8 = arith.constant 0 : index
    %8 = vector.load %arg4[%c12, %c0_8] : memref<40x128xf32, #tpu.memory_space<vmem>>, vector<16x16xf32>
    tpu.vector_store %arg4[%c12, %c0_8], %7 {strides = array<i32>} : memref<40x128xf32, #tpu.memory_space<vmem>>, vector<16x16xf32>,
    %cst_9 = arith.constant 0.000000e+00 : f32
    %9 = vector.broadcast %cst_9 : f32 to vector<28x128xf32>
    %c0_10 = arith.constant 0 : index
    %c0_11 = arith.constant 0 : index
    %10 = vector.load %arg4[%c0_10, %c0_11] : memref<40x128xf32, #tpu.memory_space<vmem>>, vector<28x128xf32>
    %c0_12 = arith.constant 0 : index
    %c0_13 = arith.constant 0 : index
    %c0_14 = arith.constant 0 : index
    %11 = vector.load %arg2[%c0_12, %c0_13, %c0_14] : memref<13x128x128xf32, #tpu.memory_space<vmem>>, vector<1x128x128xf32>
    %12 = vector.shape_cast %11 : vector<1x128x128xf32> to vector<128x128xf32>
    %cst_15 = arith.constant dense<0.000000e+00> : vector<28x128xf32>
    %13 = tpu.matmul %10, %12, %cst_15 {dimension_numbers = #tpu.dot_dimension_numbers<[1], [0], [0], [1], [0, 0, 1, 1], [], []>} : vector<28x128xf32>, vector<128x128xf32>, vector<28x128xf32> -> vector<28x128xf32>
    %14 = arith.addf %9, %13 : vector<28x128xf32>
    %c1 = arith.constant 1 : index
    %c0_16 = arith.constant 0 : index
    %15 = vector.load %arg4[%c1, %c0_16] : memref<40x128xf32, #tpu.memory_space<vmem>>, vector<28x128xf32>
    %c1_17 = arith.constant 1 : index
    %c0_18 = arith.constant 0 : index
    %c0_19 = arith.constant 0 : index
    %16 = vector.load %arg2[%c1_17, %c0_18, %c0_19] : memref<13x128x128xf32, #tpu.memory_space<vmem>>, vector<1x128x128xf32>
    %17 = vector.shape_cast %16 : vector<1x128x128xf32> to vector<128x128xf32>
    %cst_20 = arith.constant dense<0.000000e+00> : vector<28x128xf32>
    %18 = tpu.matmul %15, %17, %cst_20 {dimension_numbers = #tpu.dot_dimension_numbers<[1], [0], [0], [1], [0, 0, 1, 1], [], []>} : vector<28x128xf32>, vector<128x128xf32>, vector<28x128xf32> -> vector<28x128xf32>
    %19 = arith.addf %14, %18 : vector<28x128xf32>
    %c2 = arith.constant 2 : index
    %c0_21 = arith.constant 0 : index
    %20 = vector.load %arg4[%c2, %c0_21] : memref<40x128xf32, #tpu.memory_space<vmem>>, vector<28x128xf32>
    %c2_22 = arith.constant 2 : index
    %c0_23 = arith.constant 0 : index
    %c0_24 = arith.constant 0 : index
    %21 = vector.load %arg2[%c2_22, %c0_23, %c0_24] : memref<13x128x128xf32, #tpu.memory_space<vmem>>, vector<1x128x128xf32>
    %22 = vector.shape_cast %21 : vector<1x128x128xf32> to vector<128x128xf32>
    %cst_25 = arith.constant dense<0.000000e+00> : vector<28x128xf32>
    %23 = tpu.matmul %20, %22, %cst_25 {dimension_numbers = #tpu.dot_dimension_numbers<[1], [0], [0], [1], [0, 0, 1, 1], [], []>} : vector<28x128xf32>, vector<128x128xf32>, vector<28x128xf32> -> vector<28x128xf32>
    %24 = arith.addf %19, %23 : vector<28x128xf32>
    %c3 = arith.constant 3 : index
    %c0_26 = arith.constant 0 : index
    %25 = vector.load %arg4[%c3, %c0_26] : memref<40x128xf32, #tpu.memory_space<vmem>>, vector<28x128xf32>
    %c3_27 = arith.constant 3 : index
    %c0_28 = arith.constant 0 : index
    %c0_29 = arith.constant 0 : index
    %26 = vector.load %arg2[%c3_27, %c0_28, %c0_29] : memref<13x128x128xf32, #tpu.memory_space<vmem>>, vector<1x128x128xf32>
    %27 = vector.shape_cast %26 : vector<1x128x128xf32> to vector<128x128xf32>
    %cst_30 = arith.constant dense<0.000000e+00> : vector<28x128xf32>
    %28 = tpu.matmul %25, %27, %cst_30 {dimension_numbers = #tpu.dot_dimension_numbers<[1], [0], [0], [1], [0, 0, 1, 1], [], []>} : vector<28x128xf32>, vector<128x128xf32>, vector<28x128xf32> -> vector<28x128xf32>
    %29 = arith.addf %24, %28 : vector<28x128xf32>
    %c4 = arith.constant 4 : index
    %c0_31 = arith.constant 0 : index
    %30 = vector.load %arg4[%c4, %c0_31] : memref<40x128xf32, #tpu.memory_space<vmem>>, vector<28x128xf32>
    %c4_32 = arith.constant 4 : index
    %c0_33 = arith.constant 0 : index
    %c0_34 = arith.constant 0 : index
    %31 = vector.load %arg2[%c4_32, %c0_33, %c0_34] : memref<13x128x128xf32, #tpu.memory_space<vmem>>, vector<1x128x128xf32>
    %32 = vector.shape_cast %31 : vector<1x128x128xf32> to vector<128x128xf32>
    %cst_35 = arith.constant dense<0.000000e+00> : vector<28x128xf32>
    %33 = tpu.matmul %30, %32, %cst_35 {dimension_numbers = #tpu.dot_dimension_numbers<[1], [0], [0], [1], [0, 0, 1, 1], [], []>} : vector<28x128xf32>, vector<128x128xf32>, vector<28x128xf32> -> vector<28x128xf32>
    %34 = arith.addf %29, %33 : vector<28x128xf32>
    %c5 = arith.constant 5 : index
    %c0_36 = arith.constant 0 : index
    %35 = vector.load %arg4[%c5, %c0_36] : memref<40x128xf32, #tpu.memory_space<vmem>>, vector<28x128xf32>
    %c5_37 = arith.constant 5 : index
    %c0_38 = arith.constant 0 : index
    %c0_39 = arith.constant 0 : index
    %36 = vector.load %arg2[%c5_37, %c0_38, %c0_39] : memref<13x128x128xf32, #tpu.memory_space<vmem>>, vector<1x128x128xf32>
    %37 = vector.shape_cast %36 : vector<1x128x128xf32> to vector<128x128xf32>
    %cst_40 = arith.constant dense<0.000000e+00> : vector<28x128xf32>
    %38 = tpu.matmul %35, %37, %cst_40 {dimension_numbers = #tpu.dot_dimension_numbers<[1], [0], [0], [1], [0, 0, 1, 1], [], []>} : vector<28x128xf32>, vector<128x128xf32>, vector<28x128xf32> -> vector<28x128xf32>
    %39 = arith.addf %34, %38 : vector<28x128xf32>
    %c6 = arith.constant 6 : index
    %c0_41 = arith.constant 0 : index
    %40 = vector.load %arg4[%c6, %c0_41] : memref<40x128xf32, #tpu.memory_space<vmem>>, vector<28x128xf32>
    %c6_42 = arith.constant 6 : index
    %c0_43 = arith.constant 0 : index
    %c0_44 = arith.constant 0 : index
    %41 = vector.load %arg2[%c6_42, %c0_43, %c0_44] : memref<13x128x128xf32, #tpu.memory_space<vmem>>, vector<1x128x128xf32>
    %42 = vector.shape_cast %41 : vector<1x128x128xf32> to vector<128x128xf32>
    %cst_45 = arith.constant dense<0.000000e+00> : vector<28x128xf32>
    %43 = tpu.matmul %40, %42, %cst_45 {dimension_numbers = #tpu.dot_dimension_numbers<[1], [0], [0], [1], [0, 0, 1, 1], [], []>} : vector<28x128xf32>, vector<128x128xf32>, vector<28x128xf32> -> vector<28x128xf32>
    %44 = arith.addf %39, %43 : vector<28x128xf32>
    %c7 = arith.constant 7 : index
    %c0_46 = arith.constant 0 : index
    %45 = vector.load %arg4[%c7, %c0_46] : memref<40x128xf32, #tpu.memory_space<vmem>>, vector<28x128xf32>
    %c7_47 = arith.constant 7 : index
    %c0_48 = arith.constant 0 : index
    %c0_49 = arith.constant 0 : index
    %46 = vector.load %arg2[%c7_47, %c0_48, %c0_49] : memref<13x128x128xf32, #tpu.memory_space<vmem>>, vector<1x128x128xf32>
    %47 = vector.shape_cast %46 : vector<1x128x128xf32> to vector<128x128xf32>
    %cst_50 = arith.constant dense<0.000000e+00> : vector<28x128xf32>
    %48 = tpu.matmul %45, %47, %cst_50 {dimension_numbers = #tpu.dot_dimension_numbers<[1], [0], [0], [1], [0, 0, 1, 1], [], []>} : vector<28x128xf32>, vector<128x128xf32>, vector<28x128xf32> -> vector<28x128xf32>
    %49 = arith.addf %44, %48 : vector<28x128xf32>
    %c8 = arith.constant 8 : index
    %c0_51 = arith.constant 0 : index
    %50 = vector.load %arg4[%c8, %c0_51] : memref<40x128xf32, #tpu.memory_space<vmem>>, vector<28x128xf32>
    %c8_52 = arith.constant 8 : index
    %c0_53 = arith.constant 0 : index
    %c0_54 = arith.constant 0 : index
    %51 = vector.load %arg2[%c8_52, %c0_53, %c0_54] : memref<13x128x128xf32, #tpu.memory_space<vmem>>, vector<1x128x128xf32>
    %52 = vector.shape_cast %51 : vector<1x128x128xf32> to vector<128x128xf32>
    %cst_55 = arith.constant dense<0.000000e+00> : vector<28x128xf32>
    %53 = tpu.matmul %50, %52, %cst_55 {dimension_numbers = #tpu.dot_dimension_numbers<[1], [0], [0], [1], [0, 0, 1, 1], [], []>} : vector<28x128xf32>, vector<128x128xf32>, vector<28x128xf32> -> vector<28x128xf32>
    %54 = arith.addf %49, %53 : vector<28x128xf32>
    %c9 = arith.constant 9 : index
    %c0_56 = arith.constant 0 : index
    %55 = vector.load %arg4[%c9, %c0_56] : memref<40x128xf32, #tpu.memory_space<vmem>>, vector<28x128xf32>
    %c9_57 = arith.constant 9 : index
    %c0_58 = arith.constant 0 : index
    %c0_59 = arith.constant 0 : index
    %56 = vector.load %arg2[%c9_57, %c0_58, %c0_59] : memref<13x128x128xf32, #tpu.memory_space<vmem>>, vector<1x128x128xf32>
    %57 = vector.shape_cast %56 : vector<1x128x128xf32> to vector<128x128xf32>
    %cst_60 = arith.constant dense<0.000000e+00> : vector<28x128xf32>
    %58 = tpu.matmul %55, %57, %cst_60 {dimension_numbers = #tpu.dot_dimension_numbers<[1], [0], [0], [1], [0, 0, 1, 1], [], []>} : vector<28x128xf32>, vector<128x128xf32>, vector<28x128xf32> -> vector<28x128xf32>
    %59 = arith.addf %54, %58 : vector<28x128xf32>
    %c10 = arith.constant 10 : index
    %c0_61 = arith.constant 0 : index
    %60 = vector.load %arg4[%c10, %c0_61] : memref<40x128xf32, #tpu.memory_space<vmem>>, vector<28x128xf32>
    %c10_62 = arith.constant 10 : index
    %c0_63 = arith.constant 0 : index
    %c0_64 = arith.constant 0 : index
    %61 = vector.load %arg2[%c10_62, %c0_63, %c0_64] : memref<13x128x128xf32, #tpu.memory_space<vmem>>, vector<1x128x128xf32>
    %62 = vector.shape_cast %61 : vector<1x128x128xf32> to vector<128x128xf32>
    %cst_65 = arith.constant dense<0.000000e+00> : vector<28x128xf32>
    %63 = tpu.matmul %60, %62, %cst_65 {dimension_numbers = #tpu.dot_dimension_numbers<[1], [0], [0], [1], [0, 0, 1, 1], [], []>} : vector<28x128xf32>, vector<128x128xf32>, vector<28x128xf32> -> vector<28x128xf32>
    %64 = arith.addf %59, %63 : vector<28x128xf32>
    %c11 = arith.constant 11 : index
    %c0_66 = arith.constant 0 : index
    %65 = vector.load %arg4[%c11, %c0_66] : memref<40x128xf32, #tpu.memory_space<vmem>>, vector<28x128xf32>
    %c11_67 = arith.constant 11 : index
    %c0_68 = arith.constant 0 : index
    %c0_69 = arith.constant 0 : index
    %66 = vector.load %arg2[%c11_67, %c0_68, %c0_69] : memref<13x128x128xf32, #tpu.memory_space<vmem>>, vector<1x128x128xf32>
    %67 = vector.shape_cast %66 : vector<1x128x128xf32> to vector<128x128xf32>
    %cst_70 = arith.constant dense<0.000000e+00> : vector<28x128xf32>
    %68 = tpu.matmul %65, %67, %cst_70 {dimension_numbers = #tpu.dot_dimension_numbers<[1], [0], [0], [1], [0, 0, 1, 1], [], []>} : vector<28x128xf32>, vector<128x128xf32>, vector<28x128xf32> -> vector<28x128xf32>
    %69 = arith.addf %64, %68 : vector<28x128xf32>
    %c12_71 = arith.constant 12 : index
    %c0_72 = arith.constant 0 : index
    %70 = vector.load %arg4[%c12_71, %c0_72] : memref<40x128xf32, #tpu.memory_space<vmem>>, vector<28x128xf32>
    %c12_73 = arith.constant 12 : index
    %c0_74 = arith.constant 0 : index
    %c0_75 = arith.constant 0 : index
    %71 = vector.load %arg2[%c12_73, %c0_74, %c0_75] : memref<13x128x128xf32, #tpu.memory_space<vmem>>, vector<1x128x128xf32>
    %72 = vector.shape_cast %71 : vector<1x128x128xf32> to vector<128x128xf32>
    %cst_76 = arith.constant dense<0.000000e+00> : vector<28x128xf32>
    %73 = tpu.matmul %70, %72, %cst_76 {dimension_numbers = #tpu.dot_dimension_numbers<[1], [0], [0], [1], [0, 0, 1, 1], [], []>} : vector<28x128xf32>, vector<128x128xf32>, vector<28x128xf32> -> vector<28x128xf32>
    %74 = arith.addf %69, %73 : vector<28x128xf32>
    %c6_77 = arith.constant 6 : index
    %c0_78 = arith.constant 0 : index
    %75 = vector.load %arg4[%c6_77, %c0_78] : memref<40x128xf32, #tpu.memory_space<vmem>>, vector<28x128xf32>
    %cst_79 = arith.constant 5.000000e-01 : f32
    %76 = vector.broadcast %cst_79 : f32 to vector<28x128xf32>
    %77 = arith.subf %74, %76 : vector<28x128xf32>
    %78 = arith.mulf %77, %77 : vector<28x128xf32>
    %cst_80 = arith.constant -1.000000e+01 : f32
    %79 = vector.broadcast %cst_80 : f32 to vector<28x128xf32>
    %80 = arith.mulf %79, %78 : vector<28x128xf32>
    %81 = math.exp %80 : vector<28x128xf32>
    %cst_81 = arith.constant 5.000000e-01 : f32
    %82 = vector.broadcast %cst_81 : f32 to vector<28x128xf32>
    %83 = arith.subf %81, %82 : vector<28x128xf32>
    %cst_82 = arith.constant 1.000000e-01 : f32
    %84 = vector.broadcast %cst_82 : f32 to vector<28x128xf32>
    %85 = arith.mulf %84, %83 : vector<28x128xf32>
    %86 = arith.addf %75, %85 : vector<28x128xf32>
    %cst_83 = arith.constant 0.000000e+00 : f32
    %cst_84 = arith.constant 1.000000e+00 : f32
    %87 = vector.broadcast %cst_83 : f32 to vector<28x128xf32>
    %88 = arith.maximumf %87, %86 : vector<28x128xf32>
    %89 = vector.broadcast %cst_84 : f32 to vector<28x128xf32>
    %90 = arith.minimumf %89, %88 : vector<28x128xf32>
    %91 = vector.extract_strided_slice %90 {offsets = [6, 0], sizes = [16, 128], strides = [1, 1]} : vector<28x128xf32> to vector<16x128xf32>
    %c0_85 = arith.constant 0 : index
    %c0_86 = arith.constant 0 : index
    %c0_87 = arith.constant 0 : index
    %92 = vector.load %arg3[%c0_85, %c0_86, %c0_87] : memref<1x16x128xf32, #tpu.memory_space<vmem>>, vector<1x16x128xf32>
    %93 = vector.shape_cast %92 : vector<1x16x128xf32> to vector<16x128xf32>
    %94 = vector.shape_cast %91 : vector<16x128xf32> to vector<1x16x128xf32>
    tpu.vector_store %arg3[%c0_85, %c0_86, %c0_87], %94 {strides = array<i32>} : memref<1x16x128xf32, #tpu.memory_space<vmem>>, vector<1x16x128xf32>,
    return
  }
  func.func @transform_0(%arg0: i32) -> (i32, i32, i32) {
    %c0_i32 = arith.constant 0 : i32
    %c0_i32_0 = arith.constant 0 : i32
    %c0_i32_1 = arith.constant 0 : i32
    return %arg0, %c0_i32, %c0_i32_0 : i32, i32, i32
  }
  func.func @transform_1(%arg0: i32) -> (i32, i32, i32) {
    %c0_i32 = arith.constant 0 : i32
    %c0_i32_0 = arith.constant 0 : i32
    %c0_i32_1 = arith.constant 0 : i32
    %c0_i32_2 = arith.constant 0 : i32
    return %c0_i32, %c0_i32_0, %c0_i32_1 : i32, i32, i32
  }
  func.func @transform_2(%arg0: i32) -> (i32, i32, i32) {
    %c0_i32 = arith.constant 0 : i32
    %c0_i32_0 = arith.constant 0 : i32
    %c0_i32_1 = arith.constant 0 : i32
    return %arg0, %c0_i32, %c0_i32_0 : i32, i32, i32
  }
}

</mosaic_0001>

<llo_original>
// kernel: tpu_custom_call.1
$region0: #{tpu_custom_call.1}
  #allocation0 [shape = 'u32[]', space=smem, size = 0x4, offset = 0x4, fixed_abs, tag = 'smem constant byte address 0x4 - core index']
  #allocation1 [shape = 'u32[144,128]{1,0:T(1,128)}', space=vmem, size = 0x12000, scoped, tag = 'internal scratch']
  #allocation2 [shape = 'f32[40,128]{1,0:T(8,128)}', space=vmem, size = 0x5000, scoped, tag = 'scratch operand']
  %s0 = inlined_call_operand.hbm [shape: f32[2,16,16], index: 0, kind: input, shape index: {}]
  %s1 = inlined_call_operand.hbm [shape: f32[13,128,128], index: 1, kind: input, shape index: {}]
  %s2 = inlined_call_operand.hbm [shape: f32[2,16,128], index: 2, kind: output, shape index: {}]
  %s3 = sld [smem:[#allocation0]]
  $region49: #{tpu_custom_call.1} parent=0
    _
  %s5 = ssub.s32 1, %s3
  %s6 = scalar_select 0, %s5, %s3
  $region1: #{tpu_custom_call.1} parent=0
    #allocation3 [shape = 'u8[16384]{0}', space=vmem, size = 0x4000, scoped, tag = 'input window, operand 0']
    #allocation4 [shape = 's32[2]{0}', space=sflag, size = 0x8, scoped, tag = 'scoped memory for tpu_custom_call.1']
    #allocation5 [shape = 's32[2]{0}', space=sflag, size = 0x8, scoped, tag = 'scoped memory for tpu_custom_call.1']
    #allocation6 [shape = 'u8[851968]{0}', space=vmem, size = 0xd0000, scoped, tag = 'input window, operand 1, single buffered']
    #allocation7 [shape = 's32[1]{0}', space=sflag, size = 0x4, scoped, tag = 'scoped memory for tpu_custom_call.1']
    #allocation8 [shape = 'u8[16384]{0}', space=vmem, size = 0x4000, scoped, tag = 'output window, operand 0']
    %7 = vsyncpa [#allocation4], 0
    %s8 = scalar_lea.sflag [#allocation4], 1
    %9 = vsyncpa %s8, 0
    %10 = vsyncpa [#allocation7], 0
    %11 = vsyncpa [#allocation5], 0
    %s12 = scalar_lea.sflag [#allocation5], 1
    %13 = vsyncpa %s12, 0
    loop: start=0, step=1, limit=4
    $region2: #{tpu_custom_call.1} parent=1 // loop_pre_header
      _
    $region3: #{tpu_custom_call.1} parent=1 // loop_header
      %s15 = sphi 0, %s19
      %p16 = scmp.ge.s32.totalorder %s15, 4
      %s25 = sphi 0, %s27
      %s28 = sphi 0, %s25
      %s29 = sphi 0, %s28
      %s45 = sphi 0, %s29
      %s49 = sphi 0, %s49
      %s51 = sphi 0, %s49
      %s52 = sphi 0, %s51
      %s66 = sphi 0, %s52
      %s72 = sphi 0, %s74
      %s75 = sphi 0, %s72
      %s76 = sphi 0, %s75
      %s92 = sphi 0, %s76
    $region4: #{tpu_custom_call.1} parent=1 // loop_header_branch
      %18 = sbr.rel (%p16) target = $region8
    $region5: #{tpu_custom_call.1} parent=1 // loop_body
      %s20 = ssub.s32 %s15, 1
      %s21 = ssub.s32 %s15, 2
      %s22 = sadd.s32 %s15, 1
      %s23 = ssub.s32 %s15, %s22
      %p24 = scmp.eq.s32.totalorder %s23, 0
      %s26 = sadd.s32 %s25, 1
      %s27 = scalar_select %p24, %s25, %s26
      %p30 = pneg %p24
      %p31 = scmp.eq.s32.totalorder %s15, 1
      %p32 = por %p30, %p31
      %p33 = scmp.ne.s32.totalorder %s25, %s28
      %p34 = scmp.eq.s32.totalorder %s15, 0
      %p35 = por %p33, %p34
      %p36 = scmp.ne.s32.totalorder %s25, %s28
      %p37 = scmp.eq.s32.totalorder %s20, 1
      %p38 = por %p36, %p37
      %p39 = scmp.ne.s32.totalorder %s28, %s29
      %p40 = scmp.eq.s32.totalorder %s20, 0
      %p41 = por %p39, %p40
      %p42 = scmp.ne.s32.totalorder %s28, %s29
      %p43 = scmp.eq.s32.totalorder %s21, 1
      %p44 = por %p42, %p43
      %p46 = scmp.ne.s32.totalorder %s29, %s45
      %p47 = scmp.eq.s32.totalorder %s21, 0
      %p48 = por %p46, %p47
      %s50 = sadd.s32 %s49, 1
      %p53 = scmp.eq.s32.totalorder %s15, 1
      %p54 = scmp.ne.s32.totalorder %s49, %s51
      %p55 = scmp.eq.s32.totalorder %s15, 0
      %p56 = por %p54, %p55
      %p57 = scmp.ne.s32.totalorder %s49, %s51
      %p58 = scmp.eq.s32.totalorder %s20, 1
      %p59 = por %p57, %p58
      %p60 = scmp.ne.s32.totalorder %s51, %s52
      %p61 = scmp.eq.s32.totalorder %s20, 0
      %p62 = por %p60, %p61
      %p63 = scmp.ne.s32.totalorder %s51, %s52
      %p64 = scmp.eq.s32.totalorder %s21, 1
      %p65 = por %p63, %p64
      %p67 = scmp.ne.s32.totalorder %s52, %s66
      %p68 = scmp.eq.s32.totalorder %s21, 0
      %p69 = por %p67, %p68
      %s70 = ssub.s32 %s15, %s22
      %p71 = scmp.eq.s32.totalorder %s70, 0
      %s73 = sadd.s32 %s72, 1
      %s74 = scalar_select %p71, %s72, %s73
      %p77 = pneg %p71
      %p78 = scmp.eq.s32.totalorder %s15, 1
      %p79 = por %p77, %p78
      %p80 = scmp.ne.s32.totalorder %s72, %s75
      %p81 = scmp.eq.s32.totalorder %s15, 0
      %p82 = por %p80, %p81
      %p83 = scmp.ne.s32.totalorder %s72, %s75
      %p84 = scmp.eq.s32.totalorder %s20, 1
      %p85 = por %p83, %p84
      %p86 = scmp.ne.s32.totalorder %s75, %s76
      %p87 = scmp.eq.s32.totalorder %s20, 0
      %p88 = por %p86, %p87
      %p89 = scmp.ne.s32.totalorder %s75, %s76
      %p90 = scmp.eq.s32.totalorder %s21, 1
      %p91 = por %p89, %p90
      %p93 = scmp.ne.s32.totalorder %s76, %s92
      %p94 = scmp.eq.s32.totalorder %s21, 0
      %p95 = por %p93, %p94
      %p96 = scmp.le.s32.totalorder 1, %s15
      %p97 = scmp.lt.s32.totalorder %s15, 3
      %p98 = pnand %p96, %p97
      %p99 = pneg %p98
      // Predicated region
      $region9: #{tpu_custom_call.1} parent=5 // pred_check
        _
      $region10: #{tpu_custom_call.1} parent=5 // pred_check_branch
        %101 = sbr.rel (%p98) target = $region12
      $region11: #{tpu_custom_call.1} parent=5 // pred_region
        %s102 = ssub.s32 %s15, 1
        // Predicated region
        $region13: #{tpu_custom_call.1} parent=11 // pred_check
          %p103 = pneg %p62
        $region14: #{tpu_custom_call.1} parent=11 // pred_check_branch
          %105 = sbr.rel (%p103) target = $region16
        $region15: #{tpu_custom_call.1} parent=11 // pred_region
          %s107 = ssub.s32 26624, 26624
          %108 = vsyncadd [#allocation7], %s107
          %s109 = sshll.u32 [#allocation6], 4
          %s110 = int_to_ptr.vmem [resolvable:$true] %s109
          %115 = dma.hbm_to_vmem [thread:$0]  %s1, 26624, %s110, [#allocation7], 128, 128, 8
        $region16: #{tpu_custom_call.1} parent=11 // pred_fallthru
          _
      $region12: #{tpu_custom_call.1} parent=5 // pred_fallthru
        _
      %p116 = scmp.lt.s32.totalorder %s15, 2
      // Predicated region
      $region17: #{tpu_custom_call.1} parent=5 // pred_check
        %p117 = pneg %p116
      $region18: #{tpu_custom_call.1} parent=5 // pred_check_branch
        %119 = sbr.rel (%p117) target = $region20
      $region19: #{tpu_custom_call.1} parent=5 // pred_region
        // Predicated region
        $region21: #{tpu_custom_call.1} parent=19 // pred_check
          %p120 = pneg %p35
        $region22: #{tpu_custom_call.1} parent=19 // pred_check_branch
          %122 = sbr.rel (%p120) target = $region24
        $region23: #{tpu_custom_call.1} parent=19 // pred_region
          %s123 = sand.u32 %s25, 1
          %s124 = scalar_lea.sflag [#allocation4], %s123
          %s125 = sand.u32 %s25, 1
          %s126 = smul.addr %s125, 16
          %s127 = scalar_lea.vmem [#allocation3], %s126
          %s129 = ssub.s32 256, 256
          %130 = vsyncadd %s124, %s129
          %s131 = smul.addr %s15, 2
          %s132 = smul.addr %s131, 128
          %s133 = scalar_lea.hbm %s0, %s132
          %s134 = sshll.u32 %s127, 4
          %s135 = int_to_ptr.vmem [resolvable:$true] %s134
          %140 = dma.hbm_to_vmem [thread:$0]  %s133, 256, %s135, %s124, 128, 128, 8
        $region24: #{tpu_custom_call.1} parent=19 // pred_fallthru
          _
      $region20: #{tpu_custom_call.1} parent=5 // pred_fallthru
        _
      %p141 = scmp.le.s32.totalorder 1, %s15
      %p142 = scmp.lt.s32.totalorder %s15, 3
      %p143 = pnand %p141, %p142
      %p144 = pneg %p143
      // Predicated region
      $region25: #{tpu_custom_call.1} parent=5 // pred_check
        _
      $region26: #{tpu_custom_call.1} parent=5 // pred_check_branch
        %146 = sbr.rel (%p143) target = $region28
      $region27: #{tpu_custom_call.1} parent=5 // pred_region
        %s147 = ssub.s32 %s15, 1
        %s148 = sand.u32 %s28, 1
        %s149 = scalar_lea.sflag [#allocation4], %s148
        %s150 = sand.u32 %s28, 1
        %s151 = smul.addr %s150, 16
        %s152 = scalar_lea.vmem [#allocation3], %s151
        // Predicated region
        $region29: #{tpu_custom_call.1} parent=27 // pred_check
          %p153 = pneg %p41
        $region30: #{tpu_custom_call.1} parent=27 // pred_check_branch
          %155 = sbr.rel (%p153) target = $region32
        $region31: #{tpu_custom_call.1} parent=27 // pred_region
          %156 = dma.done %s149, 256
        $region32: #{tpu_custom_call.1} parent=27 // pred_fallthru
          _
        // Predicated region
        $region33: #{tpu_custom_call.1} parent=27 // pred_check
          %p157 = pneg %p62
        $region34: #{tpu_custom_call.1} parent=27 // pred_check_branch
          %159 = sbr.rel (%p157) target = $region36
        $region35: #{tpu_custom_call.1} parent=27 // pred_region
          %160 = dma.done [#allocation7], 26624
        $region36: #{tpu_custom_call.1} parent=27 // pred_fallthru
          _
        %s161 = sand.u32 %s28, 1
        %s162 = scalar_lea.sflag [#allocation4], %s161
        %s163 = sand.u32 %s28, 1
        %s164 = smul.addr %s163, 16
        %s165 = scalar_lea.vmem [#allocation3], %s164
        %p166 = pneg %p41
        %p167 = pneg %p38
        %p168 = pneg %p62
        %p169 = pneg %p59
        %p170 = pneg %p88
        %p171 = pneg %p85
        %s172 = sand.u32 %s75, 1
        %s173 = scalar_lea.sflag [#allocation5], %s172
        %s174 = sand.u32 %s75, 1
        %s175 = smul.addr %s174, 16
        %s176 = scalar_lea.vmem [#allocation8], %s175
        %177 = vst [vmem:[#allocation2] sm:$0xff] 0.0
        %178 = vst [vmem:[#allocation2 + $0x8] sm:$0xf] 0.0
        %179 = vst [vmem:[#allocation2 + $0x1c] sm:$0xff] 0.0
        %180 = vst [vmem:[#allocation2 + $0x24] sm:$0xf] 0.0
        %vm181 = vcmask 1047680
        %182 = vst.msk [vmem:[#allocation2] sm:$0xff] %vm181, 0.0
        %183 = vst.msk [vmem:[#allocation2 + $0x8] sm:$0xff] %vm181, 0.0
        %184 = vst.msk [vmem:[#allocation2 + $0x10] sm:$0xff] %vm181, 0.0
        %185 = vst.msk [vmem:[#allocation2 + $0x18] sm:$0xff] %vm181, 0.0
        %186 = vst.msk [vmem:[#allocation2 + $0x20] sm:$0xff] %vm181, 0.0
        %v187 = vld [vmem:[%s152] sm:$0xff]
        %v188 = vld [vmem:[%s152 + $0x8] sm:$0xff]
        %vm189 = vcmask 130048
        %190 = vst.msk [vmem:[#allocation2 + $0xc] sm:$0xff] %vm189, %v187
        %191 = vst.msk [vmem:[#allocation2 + $0x14] sm:$0xff] %vm189, %v188
        %v192 = vld [vmem:[#allocation2] sm:$0xff]
        %v193 = vld [vmem:[#allocation2 + $0x8] sm:$0xff]
        %v194 = vld [vmem:[#allocation2 + $0x10] sm:$0xff]
        %v195 = vld [vmem:[#allocation2 + $0x18] sm:$0xf]
        %v196 = vld [vmem:[#allocation6] sm:$0xff]
        %v197 = vld [vmem:[#allocation6 + $0x8] sm:$0xff]
        %v198 = vld [vmem:[#allocation6 + $0x10] sm:$0xff]
        %v199 = vld [vmem:[#allocation6 + $0x18] sm:$0xff]
        %v200 = vld [vmem:[#allocation6 + $0x20] sm:$0xff]
        %v201 = vld [vmem:[#allocation6 + $0x28] sm:$0xff]
        %v202 = vld [vmem:[#allocation6 + $0x30] sm:$0xff]
        %v203 = vld [vmem:[#allocation6 + $0x38] sm:$0xff]
        %v204 = vld [vmem:[#allocation6 + $0x40] sm:$0xff]
        %v205 = vld [vmem:[#allocation6 + $0x48] sm:$0xff]
        %v206 = vld [vmem:[#allocation6 + $0x50] sm:$0xff]
        %v207 = vld [vmem:[#allocation6 + $0x58] sm:$0xff]
        %v208 = vld [vmem:[#allocation6 + $0x60] sm:$0xff]
        %v209 = vld [vmem:[#allocation6 + $0x68] sm:$0xff]
        %v210 = vld [vmem:[#allocation6 + $0x70] sm:$0xff]
        %v211 = vld [vmem:[#allocation6 + $0x78] sm:$0xff]
        %v212 = vld [vmem:[#allocation2 + $0x1] sm:$0xff]
        %v213 = vld [vmem:[#allocation2 + $0x9] sm:$0xff]
        %v214 = vld [vmem:[#allocation2 + $0x11] sm:$0xff]
        %v215 = vld [vmem:[#allocation2 + $0x19] sm:$0xf]
        %s216 = scalar_lea.vmem [#allocation6], 128
        %v217 = vld [vmem:[%s216] sm:$0xff]
        %v218 = vld [vmem:[%s216 + $0x8] sm:$0xff]
        %v219 = vld [vmem:[%s216 + $0x10] sm:$0xff]
        %v220 = vld [vmem:[%s216 + $0x18] sm:$0xff]
        %v221 = vld [vmem:[%s216 + $0x20] sm:$0xff]
        %v222 = vld [vmem:[%s216 + $0x28] sm:$0xff]
        %v223 = vld [vmem:[%s216 + $0x30] sm:$0xff]
        %v224 = vld [vmem:[%s216 + $0x38] sm:$0xff]
        %v225 = vld [vmem:[%s216 + $0x40] sm:$0xff]
        %v226 = vld [vmem:[%s216 + $0x48] sm:$0xff]
        %v227 = vld [vmem:[%s216 + $0x50] sm:$0xff]
        %v228 = vld [vmem:[%s216 + $0x58] sm:$0xff]
        %v229 = vld [vmem:[%s216 + $0x60] sm:$0xff]
        %v230 = vld [vmem:[%s216 + $0x68] sm:$0xff]
        %v231 = vld [vmem:[%s216 + $0x70] sm:$0xff]
        %v232 = vld [vmem:[%s216 + $0x78] sm:$0xff]
        %233 = vmatprep.subr.mxu0 0.0
        %234 = vmatpush1.msra.mxu0 %v217
        %235 = vmatprep.subr.mxu0 0.0
        %236 = vmatpush1.msra.mxu0 %v218
        %237 = vmatprep.subr.mxu0 0.0
        %238 = vmatpush1.msra.mxu0 %v219
        %239 = vmatprep.subr.mxu0 0.0
        %240 = vmatpush1.msra.mxu0 %v220
        %241 = vmatprep.subr.mxu0 0.0
        %242 = vmatpush1.msra.mxu0 %v221
        %243 = vmatprep.subr.mxu0 0.0
        %244 = vmatpush1.msra.mxu0 %v222
        %245 = vmatprep.subr.mxu0 0.0
        %246 = vmatpush1.msra.mxu0 %v223
        %247 = vmatprep.subr.mxu0 0.0
        %248 = vmatpush1.msra.mxu0 %v224
        %249 = vmatprep.subr.mxu0 0.0
        %250 = vmatpush1.msra.mxu0 %v225
        %251 = vmatprep.subr.mxu0 0.0
        %252 = vmatpush1.msra.mxu0 %v226
        %253 = vmatprep.subr.mxu0 0.0
        %254 = vmatpush1.msra.mxu0 %v227
        %255 = vmatprep.subr.mxu0 0.0
        %256 = vmatpush1.msra.mxu0 %v228
        %257 = vmatprep.subr.mxu0 0.0
        %258 = vmatpush1.msra.mxu0 %v229
        %259 = vmatprep.subr.mxu0 0.0
        %260 = vmatpush1.msra.mxu0 %v230
        %261 = vmatprep.subr.mxu0 0.0
        %262 = vmatpush1.msra.mxu0 %v231
        %263 = vmatprep.subr.mxu0 0.0
        %264 = vmatpush1.msra.mxu0 %v232
        %265 = vmatprep.subr.mxu0 0.0
        %266 = vmatpush1.msra.mxu0 0.0
        %267 = vmatprep.subr.mxu0 0.0
        %268 = vmatpush1.msra.mxu0 0.0
        %269 = vmatprep.subr.mxu0 0.0
        %270 = vmatpush1.msra.mxu0 0.0
        %271 = vmatprep.subr.mxu0 0.0
        %272 = vmatpush1.msra.mxu0 0.0
        %273 = vmatprep.subr.mxu0 0.0
        %274 = vmatpush1.msra.mxu0 0.0
        %275 = vmatprep.subr.mxu0 0.0
        %276 = vmatpush1.msra.mxu0 0.0
        %277 = vmatprep.subr.mxu0 0.0
        %278 = vmatpush1.msra.mxu0 0.0
        %279 = vmatprep.subr.mxu0 0.0
        %280 = vmatpush1.msra.mxu0 0.0
        %281 = vmatprep.subr.mxu0 0.0
        %282 = vmatpush1.msra.mxu0 0.0
        %283 = vmatprep.subr.mxu0 0.0
        %284 = vmatpush1.msra.mxu0 0.0
        %285 = vmatprep.subr.mxu0 0.0
        %286 = vmatpush1.msra.mxu0 0.0
        %287 = vmatprep.subr.mxu0 0.0
        %288 = vmatpush1.msra.mxu0 0.0
        %289 = vmatprep.subr.mxu0 0.0
        %290 = vmatpush1.msra.mxu0 0.0
        %291 = vmatprep.subr.mxu0 0.0
        %292 = vmatpush1.msra.mxu0 0.0
        %293 = vmatprep.subr.mxu0 0.0
        %294 = vmatpush1.msra.mxu0 0.0
        %295 = vmatprep.subr.mxu0 0.0
        %296 = vmatpush1.msra.mxu0 0.0
        %297 = vmatprep.mubr.f32.mxu0 0.0
        %298 = vmatmul.mubr.f32.gmra.mrb[0].mxu0 %v212
        %v299 = vpop.f32.mrb[0].mxu0
        %v300 = vadd.f32 0.0, %v299
        %v301 = vpop.f32.mrb[0].mxu0
        %302 = vmatprep.mubr.f32.mxu0 0.0
        %303 = vmatmul.mubr.f32.gmra.mrb[0].mxu0 %v213
        %v304 = vpop.f32.mrb[0].mxu0
        %v305 = vadd.f32 0.0, %v304
        %v306 = vpop.f32.mrb[0].mxu0
        %307 = vmatprep.mubr.f32.mxu0 0.0
        %308 = vmatmul.mubr.f32.gmra.mrb[0].mxu0 %v214
        %v309 = vpop.f32.mrb[0].mxu0
        %v310 = vadd.f32 0.0, %v309
        %v311 = vpop.f32.mrb[0].mxu0
        %312 = vmatprep.mubr.f32.mxu0 0.0
        %313 = vmatmul.mubr.f32.gmra.mrb[0].mxu0 %v215
        %v314 = vpop.f32.mrb[0].mxu0
        %v315 = vpop.f32.mrb[0].mxu0
        %316 = vdwg.mxu0
        %317 = vmatprep.subr.mxu0 0.0
        %318 = vmatpush1.msra.mxu0 %v196
        %319 = vmatprep.subr.mxu0 0.0
        %320 = vmatpush1.msra.mxu0 %v197
        %321 = vmatprep.subr.mxu0 0.0
        %322 = vmatpush1.msra.mxu0 %v198
        %323 = vmatprep.subr.mxu0 0.0
        %324 = vmatpush1.msra.mxu0 %v199
        %325 = vmatprep.subr.mxu0 0.0
        %326 = vmatpush1.msra.mxu0 %v200
        %327 = vmatprep.subr.mxu0 0.0
        %328 = vmatpush1.msra.mxu0 %v201
        %329 = vmatprep.subr.mxu0 0.0
        %330 = vmatpush1.msra.mxu0 %v202
        %331 = vmatprep.subr.mxu0 0.0
        %332 = vmatpush1.msra.mxu0 %v203
        %333 = vmatprep.subr.mxu0 0.0
        %334 = vmatpush1.msra.mxu0 %v204
        %335 = vmatprep.subr.mxu0 0.0
        %336 = vmatpush1.msra.mxu0 %v205
        %337 = vmatprep.subr.mxu0 0.0
        %338 = vmatpush1.msra.mxu0 %v206
        %339 = vmatprep.subr.mxu0 0.0
        %340 = vmatpush1.msra.mxu0 %v207
        %341 = vmatprep.subr.mxu0 0.0
        %342 = vmatpush1.msra.mxu0 %v208
        %343 = vmatprep.subr.mxu0 0.0
        %344 = vmatpush1.msra.mxu0 %v209
        %345 = vmatprep.subr.mxu0 0.0
        %346 = vmatpush1.msra.mxu0 %v210
        %347 = vmatprep.subr.mxu0 0.0
        %348 = vmatpush1.msra.mxu0 %v211
        %349 = vmatprep.subr.mxu0 0.0
        %350 = vmatpush1.msra.mxu0 0.0
        %351 = vmatprep.subr.mxu0 0.0
        %352 = vmatpush1.msra.mxu0 0.0
        %353 = vmatprep.subr.mxu0 0.0
        %354 = vmatpush1.msra.mxu0 0.0
        %355 = vmatprep.subr.mxu0 0.0
        %356 = vmatpush1.msra.mxu0 0.0
        %357 = vmatprep.subr.mxu0 0.0
        %358 = vmatpush1.msra.mxu0 0.0
        %359 = vmatprep.subr.mxu0 0.0
        %360 = vmatpush1.msra.mxu0 0.0
        %361 = vmatprep.subr.mxu0 0.0
        %362 = vmatpush1.msra.mxu0 0.0
        %363 = vmatprep.subr.mxu0 0.0
        %364 = vmatpush1.msra.mxu0 0.0
        %365 = vmatprep.subr.mxu0 0.0
        %366 = vmatpush1.msra.mxu0 0.0
        %367 = vmatprep.subr.mxu0 0.0
        %368 = vmatpush1.msra.mxu0 0.0
        %369 = vmatprep.subr.mxu0 0.0
        %370 = vmatpush1.msra.mxu0 0.0
        %371 = vmatprep.subr.mxu0 0.0
        %372 = vmatpush1.msra.mxu0 0.0
        %373 = vmatprep.subr.mxu0 0.0
        %374 = vmatpush1.msra.mxu0 0.0
        %375 = vmatprep.subr.mxu0 0.0
        %376 = vmatpush1.msra.mxu0 0.0
        %377 = vmatprep.subr.mxu0 0.0
        %378 = vmatpush1.msra.mxu0 0.0
        %379 = vmatprep.subr.mxu0 0.0
        %380 = vmatpush1.msra.mxu0 0.0
        %381 = vmatprep.mubr.f32.mxu0 0.0
        %382 = vmatmul.mubr.f32.gmra.mrb[0].mxu0 %v192
        %v383 = vpop.f32.mrb[0].mxu0
        %v384 = vadd.f32 %v300, %v383
        %v385 = vpop.f32.mrb[0].mxu0
        %386 = vmatprep.mubr.f32.mxu0 0.0
        %387 = vmatmul.mubr.f32.gmra.mrb[0].mxu0 %v193
        %v388 = vpop.f32.mrb[0].mxu0
        %v389 = vadd.f32 %v305, %v388
        %v390 = vpop.f32.mrb[0].mxu0
        %391 = vmatprep.mubr.f32.mxu0 0.0
        %392 = vmatmul.mubr.f32.gmra.mrb[0].mxu0 %v194
        %v393 = vpop.f32.mrb[0].mxu0
        %v394 = vadd.f32 %v310, %v393
        %v395 = vpop.f32.mrb[0].mxu0
        %396 = vmatprep.mubr.f32.mxu0 0.0
        %397 = vmatmul.mubr.f32.gmra.mrb[0].mxu0 %v195
        %v398 = vpop.f32.mrb[0].mxu0
        %v399 = vpop.f32.mrb[0].mxu0
        %400 = vdwg.mxu0
        %v401 = vld [vmem:[#allocation2 + $0x2] sm:$0xff]
        %v402 = vld [vmem:[#allocation2 + $0xa] sm:$0xff]
        %v403 = vld [vmem:[#allocation2 + $0x12] sm:$0xff]
        %v404 = vld [vmem:[#allocation2 + $0x1a] sm:$0xf]
        %s405 = scalar_lea.vmem [#allocation6], 256
        %v406 = vld [vmem:[%s405] sm:$0xff]
        %v407 = vld [vmem:[%s405 + $0x8] sm:$0xff]
        %v408 = vld [vmem:[%s405 + $0x10] sm:$0xff]
        %v409 = vld [vmem:[%s405 + $0x18] sm:$0xff]
        %v410 = vld [vmem:[%s405 + $0x20] sm:$0xff]
        %v411 = vld [vmem:[%s405 + $0x28] sm:$0xff]
        %v412 = vld [vmem:[%s405 + $0x30] sm:$0xff]
        %v413 = vld [vmem:[%s405 + $0x38] sm:$0xff]
        %v414 = vld [vmem:[%s405 + $0x40] sm:$0xff]
        %v415 = vld [vmem:[%s405 + $0x48] sm:$0xff]
        %v416 = vld [vmem:[%s405 + $0x50] sm:$0xff]
        %v417 = vld [vmem:[%s405 + $0x58] sm:$0xff]
        %v418 = vld [vmem:[%s405 + $0x60] sm:$0xff]
        %v419 = vld [vmem:[%s405 + $0x68] sm:$0xff]
        %v420 = vld [vmem:[%s405 + $0x70] sm:$0xff]
        %v421 = vld [vmem:[%s405 + $0x78] sm:$0xff]
        %422 = vmatprep.subr.mxu0 0.0
        %423 = vmatpush1.msra.mxu0 %v406
        %424 = vmatprep.subr.mxu0 0.0
        %425 = vmatpush1.msra.mxu0 %v407
        %426 = vmatprep.subr.mxu0 0.0
        %427 = vmatpush1.msra.mxu0 %v408
        %428 = vmatprep.subr.mxu0 0.0
        %429 = vmatpush1.msra.mxu0 %v409
        %430 = vmatprep.subr.mxu0 0.0
        %431 = vmatpush1.msra.mxu0 %v410
        %432 = vmatprep.subr.mxu0 0.0
        %433 = vmatpush1.msra.mxu0 %v411
        %434 = vmatprep.subr.mxu0 0.0
        %435 = vmatpush1.msra.mxu0 %v412
        %436 = vmatprep.subr.mxu0 0.0
        %437 = vmatpush1.msra.mxu0 %v413
        %438 = vmatprep.subr.mxu0 0.0
        %439 = vmatpush1.msra.mxu0 %v414
        %440 = vmatprep.subr.mxu0 0.0
        %441 = vmatpush1.msra.mxu0 %v415
        %442 = vmatprep.subr.mxu0 0.0
        %443 = vmatpush1.msra.mxu0 %v416
        %444 = vmatprep.subr.mxu0 0.0
        %445 = vmatpush1.msra.mxu0 %v417
        %446 = vmatprep.subr.mxu0 0.0
        %447 = vmatpush1.msra.mxu0 %v418
        %448 = vmatprep.subr.mxu0 0.0
        %449 = vmatpush1.msra.mxu0 %v419
        %450 = vmatprep.subr.mxu0 0.0
        %451 = vmatpush1.msra.mxu0 %v420
        %452 = vmatprep.subr.mxu0 0.0
        %453 = vmatpush1.msra.mxu0 %v421
        %454 = vmatprep.subr.mxu0 0.0
        %455 = vmatpush1.msra.mxu0 0.0
        %456 = vmatprep.subr.mxu0 0.0
        %457 = vmatpush1.msra.mxu0 0.0
        %458 = vmatprep.subr.mxu0 0.0
        %459 = vmatpush1.msra.mxu0 0.0
        %460 = vmatprep.subr.mxu0 0.0
        %461 = vmatpush1.msra.mxu0 0.0
        %462 = vmatprep.subr.mxu0 0.0
        %463 = vmatpush1.msra.mxu0 0.0
        %464 = vmatprep.subr.mxu0 0.0
        %465 = vmatpush1.msra.mxu0 0.0
        %466 = vmatprep.subr.mxu0 0.0
        %467 = vmatpush1.msra.mxu0 0.0
        %468 = vmatprep.subr.mxu0 0.0
        %469 = vmatpush1.msra.mxu0 0.0
        %470 = vmatprep.subr.mxu0 0.0
        %471 = vmatpush1.msra.mxu0 0.0
        %472 = vmatprep.subr.mxu0 0.0
        %473 = vmatpush1.msra.mxu0 0.0
        %474 = vmatprep.subr.mxu0 0.0
        %475 = vmatpush1.msra.mxu0 0.0
        %476 = vmatprep.subr.mxu0 0.0
        %477 = vmatpush1.msra.mxu0 0.0
        %478 = vmatprep.subr.mxu0 0.0
        %479 = vmatpush1.msra.mxu0 0.0
        %480 = vmatprep.subr.mxu0 0.0
        %481 = vmatpush1.msra.mxu0 0.0
        %482 = vmatprep.subr.mxu0 0.0
        %483 = vmatpush1.msra.mxu0 0.0
        %484 = vmatprep.subr.mxu0 0.0
        %485 = vmatpush1.msra.mxu0 0.0
        %486 = vmatprep.mubr.f32.mxu0 0.0
        %487 = vmatmul.mubr.f32.gmra.mrb[0].mxu0 %v401
        %v488 = vpop.f32.mrb[0].mxu0
        %v489 = vadd.f32 0.0, %v488
        %v490 = vpop.f32.mrb[0].mxu0
        %491 = vmatprep.mubr.f32.mxu0 0.0
        %492 = vmatmul.mubr.f32.gmra.mrb[0].mxu0 %v402
        %v493 = vpop.f32.mrb[0].mxu0
        %v494 = vadd.f32 0.0, %v493
        %v495 = vpop.f32.mrb[0].mxu0
        %496 = vmatprep.mubr.f32.mxu0 0.0
        %497 = vmatmul.mubr.f32.gmra.mrb[0].mxu0 %v403
        %v498 = vpop.f32.mrb[0].mxu0
        %v499 = vadd.f32 0.0, %v498
        %v500 = vpop.f32.mrb[0].mxu0
        %501 = vmatprep.mubr.f32.mxu0 0.0
        %502 = vmatmul.mubr.f32.gmra.mrb[0].mxu0 %v404
        %v503 = vpop.f32.mrb[0].mxu0
        %v504 = vpop.f32.mrb[0].mxu0
        %505 = vdwg.mxu0
        %v506 = vadd.f32 %v384, %v489
        %v507 = vadd.f32 %v389, %v494
        %v508 = vadd.f32 %v394, %v499
        %v509 = vld [vmem:[#allocation2 + $0x3] sm:$0xff]
        %v510 = vld [vmem:[#allocation2 + $0xb] sm:$0xff]
        %v511 = vld [vmem:[#allocation2 + $0x13] sm:$0xff]
        %v512 = vld [vmem:[#allocation2 + $0x1b] sm:$0xf]
        %s513 = scalar_lea.vmem [#allocation6], 384
        %v514 = vld [vmem:[%s513] sm:$0xff]
        %v515 = vld [vmem:[%s513 + $0x8] sm:$0xff]
        %v516 = vld [vmem:[%s513 + $0x10] sm:$0xff]
        %v517 = vld [vmem:[%s513 + $0x18] sm:$0xff]
        %v518 = vld [vmem:[%s513 + $0x20] sm:$0xff]
        %v519 = vld [vmem:[%s513 + $0x28] sm:$0xff]
        %v520 = vld [vmem:[%s513 + $0x30] sm:$0xff]
        %v521 = vld [vmem:[%s513 + $0x38] sm:$0xff]
        %v522 = vld [vmem:[%s513 + $0x40] sm:$0xff]
        %v523 = vld [vmem:[%s513 + $0x48] sm:$0xff]
        %v524 = vld [vmem:[%s513 + $0x50] sm:$0xff]
        %v525 = vld [vmem:[%s513 + $0x58] sm:$0xff]
        %v526 = vld [vmem:[%s513 + $0x60] sm:$0xff]
        %v527 = vld [vmem:[%s513 + $0x68] sm:$0xff]
        %v528 = vld [vmem:[%s513 + $0x70] sm:$0xff]
        %v529 = vld [vmem:[%s513 + $0x78] sm:$0xff]
        %530 = vmatprep.subr.mxu0 0.0
        %531 = vmatpush1.msra.mxu0 %v514
        %532 = vmatprep.subr.mxu0 0.0
        %533 = vmatpush1.msra.mxu0 %v515
        %534 = vmatprep.subr.mxu0 0.0
        %535 = vmatpush1.msra.mxu0 %v516
        %536 = vmatprep.subr.mxu0 0.0
        %537 = vmatpush1.msra.mxu0 %v517
        %538 = vmatprep.subr.mxu0 0.0
        %539 = vmatpush1.msra.mxu0 %v518
        %540 = vmatprep.subr.mxu0 0.0
        %541 = vmatpush1.msra.mxu0 %v519
        %542 = vmatprep.subr.mxu0 0.0
        %543 = vmatpush1.msra.mxu0 %v520
        %544 = vmatprep.subr.mxu0 0.0
        %545 = vmatpush1.msra.mxu0 %v521
        %546 = vmatprep.subr.mxu0 0.0
        %547 = vmatpush1.msra.mxu0 %v522
        %548 = vmatprep.subr.mxu0 0.0
        %549 = vmatpush1.msra.mxu0 %v523
        %550 = vmatprep.subr.mxu0 0.0
        %551 = vmatpush1.msra.mxu0 %v524
        %552 = vmatprep.subr.mxu0 0.0
        %553 = vmatpush1.msra.mxu0 %v525
        %554 = vmatprep.subr.mxu0 0.0
        %555 = vmatpush1.msra.mxu0 %v526
        %556 = vmatprep.subr.mxu0 0.0
        %557 = vmatpush1.msra.mxu0 %v527
        %558 = vmatprep.subr.mxu0 0.0
        %559 = vmatpush1.msra.mxu0 %v528
        %560 = vmatprep.subr.mxu0 0.0
        %561 = vmatpush1.msra.mxu0 %v529
        %562 = vmatprep.subr.mxu0 0.0
        %563 = vmatpush1.msra.mxu0 0.0
        %564 = vmatprep.subr.mxu0 0.0
        %565 = vmatpush1.msra.mxu0 0.0
        %566 = vmatprep.subr.mxu0 0.0
        %567 = vmatpush1.msra.mxu0 0.0
        %568 = vmatprep.subr.mxu0 0.0
        %569 = vmatpush1.msra.mxu0 0.0
        %570 = vmatprep.subr.mxu0 0.0
        %571 = vmatpush1.msra.mxu0 0.0
        %572 = vmatprep.subr.mxu0 0.0
        %573 = vmatpush1.msra.mxu0 0.0
        %574 = vmatprep.subr.mxu0 0.0
        %575 = vmatpush1.msra.mxu0 0.0
        %576 = vmatprep.subr.mxu0 0.0
        %577 = vmatpush1.msra.mxu0 0.0
        %578 = vmatprep.subr.mxu0 0.0
        %579 = vmatpush1.msra.mxu0 0.0
        %580 = vmatprep.subr.mxu0 0.0
        %581 = vmatpush1.msra.mxu0 0.0
        %582 = vmatprep.subr.mxu0 0.0
        %583 = vmatpush1.msra.mxu0 0.0
        %584 = vmatprep.subr.mxu0 0.0
        %585 = vmatpush1.msra.mxu0 0.0
        %586 = vmatprep.subr.mxu0 0.0
        %587 = vmatpush1.msra.mxu0 0.0
        %588 = vmatprep.subr.mxu0 0.0
        %589 = vmatpush1.msra.mxu0 0.0
        %590 = vmatprep.subr.mxu0 0.0
        %591 = vmatpush1.msra.mxu0 0.0
        %592 = vmatprep.subr.mxu0 0.0
        %593 = vmatpush1.msra.mxu0 0.0
        %594 = vmatprep.mubr.f32.mxu0 0.0
        %595 = vmatmul.mubr.f32.gmra.mrb[0].mxu0 %v509
        %v596 = vpop.f32.mrb[0].mxu0
        %v597 = vadd.f32 0.0, %v596
        %v598 = vpop.f32.mrb[0].mxu0
        %599 = vmatprep.mubr.f32.mxu0 0.0
        %600 = vmatmul.mubr.f32.gmra.mrb[0].mxu0 %v510
        %v601 = vpop.f32.mrb[0].mxu0
        %v602 = vadd.f32 0.0, %v601
        %v603 = vpop.f32.mrb[0].mxu0
        %604 = vmatprep.mubr.f32.mxu0 0.0
        %605 = vmatmul.mubr.f32.gmra.mrb[0].mxu0 %v511
        %v606 = vpop.f32.mrb[0].mxu0
        %v607 = vadd.f32 0.0, %v606
        %v608 = vpop.f32.mrb[0].mxu0
        %609 = vmatprep.mubr.f32.mxu0 0.0
        %610 = vmatmul.mubr.f32.gmra.mrb[0].mxu0 %v512
        %v611 = vpop.f32.mrb[0].mxu0
        %v612 = vpop.f32.mrb[0].mxu0
        %613 = vdwg.mxu0
        %v614 = vadd.f32 %v506, %v597
        %v615 = vadd.f32 %v507, %v602
        %v616 = vadd.f32 %v508, %v607
        %v617 = vld [vmem:[#allocation2 + $0x4] sm:$0xff]
        %v618 = vld [vmem:[#allocation2 + $0xc] sm:$0xff]
        %v619 = vld [vmem:[#allocation2 + $0x14] sm:$0xff]
        %v620 = vld [vmem:[#allocation2 + $0x1c] sm:$0xf]
        %s621 = scalar_lea.vmem [#allocation6], 512
        %v622 = vld [vmem:[%s621] sm:$0xff]
        %v623 = vld [vmem:[%s621 + $0x8] sm:$0xff]
        %v624 = vld [vmem:[%s621 + $0x10] sm:$0xff]
        %v625 = vld [vmem:[%s621 + $0x18] sm:$0xff]
        %v626 = vld [vmem:[%s621 + $0x20] sm:$0xff]
        %v627 = vld [vmem:[%s621 + $0x28] sm:$0xff]
        %v628 = vld [vmem:[%s621 + $0x30] sm:$0xff]
        %v629 = vld [vmem:[%s621 + $0x38] sm:$0xff]
        %v630 = vld [vmem:[%s621 + $0x40] sm:$0xff]
        %v631 = vld [vmem:[%s621 + $0x48] sm:$0xff]
        %v632 = vld [vmem:[%s621 + $0x50] sm:$0xff]
        %v633 = vld [vmem:[%s621 + $0x58] sm:$0xff]
        %v634 = vld [vmem:[%s621 + $0x60] sm:$0xff]
        %v635 = vld [vmem:[%s621 + $0x68] sm:$0xff]
        %v636 = vld [vmem:[%s621 + $0x70] sm:$0xff]
        %v637 = vld [vmem:[%s621 + $0x78] sm:$0xff]
        %638 = vmatprep.subr.mxu0 0.0
        %639 = vmatpush1.msra.mxu0 %v622
        %640 = vmatprep.subr.mxu0 0.0
        %641 = vmatpush1.msra.mxu0 %v623
        %642 = vmatprep.subr.mxu0 0.0
        %643 = vmatpush1.msra.mxu0 %v624
        %644 = vmatprep.subr.mxu0 0.0
        %645 = vmatpush1.msra.mxu0 %v625
        %646 = vmatprep.subr.mxu0 0.0
        %647 = vmatpush1.msra.mxu0 %v626
        %648 = vmatprep.subr.mxu0 0.0
        %649 = vmatpush1.msra.mxu0 %v627
        %650 = vmatprep.subr.mxu0 0.0
        %651 = vmatpush1.msra.mxu0 %v628
        %652 = vmatprep.subr.mxu0 0.0
        %653 = vmatpush1.msra.mxu0 %v629
        %654 = vmatprep.subr.mxu0 0.0
        %655 = vmatpush1.msra.mxu0 %v630
        %656 = vmatprep.subr.mxu0 0.0
        %657 = vmatpush1.msra.mxu0 %v631
        %658 = vmatprep.subr.mxu0 0.0
        %659 = vmatpush1.msra.mxu0 %v632
        %660 = vmatprep.subr.mxu0 0.0
        %661 = vmatpush1.msra.mxu0 %v633
        %662 = vmatprep.subr.mxu0 0.0
        %663 = vmatpush1.msra.mxu0 %v634
        %664 = vmatprep.subr.mxu0 0.0
        %665 = vmatpush1.msra.mxu0 %v635
        %666 = vmatprep.subr.mxu0 0.0
        %667 = vmatpush1.msra.mxu0 %v636
        %668 = vmatprep.subr.mxu0 0.0
        %669 = vmatpush1.msra.mxu0 %v637
        %670 = vmatprep.subr.mxu0 0.0
        %671 = vmatpush1.msra.mxu0 0.0
        %672 = vmatprep.subr.mxu0 0.0
        %673 = vmatpush1.msra.mxu0 0.0
        %674 = vmatprep.subr.mxu0 0.0
        %675 = vmatpush1.msra.mxu0 0.0
        %676 = vmatprep.subr.mxu0 0.0
        %677 = vmatpush1.msra.mxu0 0.0
        %678 = vmatprep.subr.mxu0 0.0
        %679 = vmatpush1.msra.mxu0 0.0
        %680 = vmatprep.subr.mxu0 0.0
        %681 = vmatpush1.msra.mxu0 0.0
        %682 = vmatprep.subr.mxu0 0.0
        %683 = vmatpush1.msra.mxu0 0.0
        %684 = vmatprep.subr.mxu0 0.0
        %685 = vmatpush1.msra.mxu0 0.0
        %686 = vmatprep.subr.mxu0 0.0
        %687 = vmatpush1.msra.mxu0 0.0
        %688 = vmatprep.subr.mxu0 0.0
        %689 = vmatpush1.msra.mxu0 0.0
        %690 = vmatprep.subr.mxu0 0.0
        %691 = vmatpush1.msra.mxu0 0.0
        %692 = vmatprep.subr.mxu0 0.0
        %693 = vmatpush1.msra.mxu0 0.0
        %694 = vmatprep.subr.mxu0 0.0
        %695 = vmatpush1.msra.mxu0 0.0
        %696 = vmatprep.subr.mxu0 0.0
        %697 = vmatpush1.msra.mxu0 0.0
        %698 = vmatprep.subr.mxu0 0.0
        %699 = vmatpush1.msra.mxu0 0.0
        %700 = vmatprep.subr.mxu0 0.0
        %701 = vmatpush1.msra.mxu0 0.0
        %702 = vmatprep.mubr.f32.mxu0 0.0
        %703 = vmatmul.mubr.f32.gmra.mrb[0].mxu0 %v617
        %v704 = vpop.f32.mrb[0].mxu0
        %v705 = vadd.f32 0.0, %v704
        %v706 = vpop.f32.mrb[0].mxu0
        %707 = vmatprep.mubr.f32.mxu0 0.0
        %708 = vmatmul.mubr.f32.gmra.mrb[0].mxu0 %v618
        %v709 = vpop.f32.mrb[0].mxu0
        %v710 = vadd.f32 0.0, %v709
        %v711 = vpop.f32.mrb[0].mxu0
        %712 = vmatprep.mubr.f32.mxu0 0.0
        %713 = vmatmul.mubr.f32.gmra.mrb[0].mxu0 %v619
        %v714 = vpop.f32.mrb[0].mxu0
        %v715 = vadd.f32 0.0, %v714
        %v716 = vpop.f32.mrb[0].mxu0
        %717 = vmatprep.mubr.f32.mxu0 0.0
        %718 = vmatmul.mubr.f32.gmra.mrb[0].mxu0 %v620
        %v719 = vpop.f32.mrb[0].mxu0
        %v720 = vpop.f32.mrb[0].mxu0
        %721 = vdwg.mxu0
        %v722 = vadd.f32 %v614, %v705
        %v723 = vadd.f32 %v615, %v710
        %v724 = vadd.f32 %v616, %v715
        %v725 = vld [vmem:[#allocation2 + $0x5] sm:$0xff]
        %v726 = vld [vmem:[#allocation2 + $0xd] sm:$0xff]
        %v727 = vld [vmem:[#allocation2 + $0x15] sm:$0xff]
        %v728 = vld [vmem:[#allocation2 + $0x1d] sm:$0xf]
        %s729 = scalar_lea.vmem [#allocation6], 640
        %v730 = vld [vmem:[%s729] sm:$0xff]
        %v731 = vld [vmem:[%s729 + $0x8] sm:$0xff]
        %v732 = vld [vmem:[%s729 + $0x10] sm:$0xff]
        %v733 = vld [vmem:[%s729 + $0x18] sm:$0xff]
        %v734 = vld [vmem:[%s729 + $0x20] sm:$0xff]
        %v735 = vld [vmem:[%s729 + $0x28] sm:$0xff]
        %v736 = vld [vmem:[%s729 + $0x30] sm:$0xff]
        %v737 = vld [vmem:[%s729 + $0x38] sm:$0xff]
        %v738 = vld [vmem:[%s729 + $0x40] sm:$0xff]
        %v739 = vld [vmem:[%s729 + $0x48] sm:$0xff]
        %v740 = vld [vmem:[%s729 + $0x50] sm:$0xff]
        %v741 = vld [vmem:[%s729 + $0x58] sm:$0xff]
        %v742 = vld [vmem:[%s729 + $0x60] sm:$0xff]
        %v743 = vld [vmem:[%s729 + $0x68] sm:$0xff]
        %v744 = vld [vmem:[%s729 + $0x70] sm:$0xff]
        %v745 = vld [vmem:[%s729 + $0x78] sm:$0xff]
        %746 = vmatprep.subr.mxu0 0.0
        %747 = vmatpush1.msra.mxu0 %v730
        %748 = vmatprep.subr.mxu0 0.0
        %749 = vmatpush1.msra.mxu0 %v731
        %750 = vmatprep.subr.mxu0 0.0
        %751 = vmatpush1.msra.mxu0 %v732
        %752 = vmatprep.subr.mxu0 0.0
        %753 = vmatpush1.msra.mxu0 %v733
        %754 = vmatprep.subr.mxu0 0.0
        %755 = vmatpush1.msra.mxu0 %v734
        %756 = vmatprep.subr.mxu0 0.0
        %757 = vmatpush1.msra.mxu0 %v735
        %758 = vmatprep.subr.mxu0 0.0
        %759 = vmatpush1.msra.mxu0 %v736
        %760 = vmatprep.subr.mxu0 0.0
        %761 = vmatpush1.msra.mxu0 %v737
        %762 = vmatprep.subr.mxu0 0.0
        %763 = vmatpush1.msra.mxu0 %v738
        %764 = vmatprep.subr.mxu0 0.0
        %765 = vmatpush1.msra.mxu0 %v739
        %766 = vmatprep.subr.mxu0 0.0
        %767 = vmatpush1.msra.mxu0 %v740
        %768 = vmatprep.subr.mxu0 0.0
        %769 = vmatpush1.msra.mxu0 %v741
        %770 = vmatprep.subr.mxu0 0.0
        %771 = vmatpush1.msra.mxu0 %v742
        %772 = vmatprep.subr.mxu0 0.0
        %773 = vmatpush1.msra.mxu0 %v743
        %774 = vmatprep.subr.mxu0 0.0
        %775 = vmatpush1.msra.mxu0 %v744
        %776 = vmatprep.subr.mxu0 0.0
        %777 = vmatpush1.msra.mxu0 %v745
        %778 = vmatprep.subr.mxu0 0.0
        %779 = vmatpush1.msra.mxu0 0.0
        %780 = vmatprep.subr.mxu0 0.0
        %781 = vmatpush1.msra.mxu0 0.0
        %782 = vmatprep.subr.mxu0 0.0
        %783 = vmatpush1.msra.mxu0 0.0
        %784 = vmatprep.subr.mxu0 0.0
        %785 = vmatpush1.msra.mxu0 0.0
        %786 = vmatprep.subr.mxu0 0.0
        %787 = vmatpush1.msra.mxu0 0.0
        %788 = vmatprep.subr.mxu0 0.0
        %789 = vmatpush1.msra.mxu0 0.0
        %790 = vmatprep.subr.mxu0 0.0
        %791 = vmatpush1.msra.mxu0 0.0
        %792 = vmatprep.subr.mxu0 0.0
        %793 = vmatpush1.msra.mxu0 0.0
        %794 = vmatprep.subr.mxu0 0.0
        %795 = vmatpush1.msra.mxu0 0.0
        %796 = vmatprep.subr.mxu0 0.0
        %797 = vmatpush1.msra.mxu0 0.0
        %798 = vmatprep.subr.mxu0 0.0
        %799 = vmatpush1.msra.mxu0 0.0
        %800 = vmatprep.subr.mxu0 0.0
        %801 = vmatpush1.msra.mxu0 0.0
        %802 = vmatprep.subr.mxu0 0.0
        %803 = vmatpush1.msra.mxu0 0.0
        %804 = vmatprep.subr.mxu0 0.0
        %805 = vmatpush1.msra.mxu0 0.0
        %806 = vmatprep.subr.mxu0 0.0
        %807 = vmatpush1.msra.mxu0 0.0
        %808 = vmatprep.subr.mxu0 0.0
        %809 = vmatpush1.msra.mxu0 0.0
        %810 = vmatprep.mubr.f32.mxu0 0.0
        %811 = vmatmul.mubr.f32.gmra.mrb[0].mxu0 %v725
        %v812 = vpop.f32.mrb[0].mxu0
        %v813 = vadd.f32 0.0, %v812
        %v814 = vpop.f32.mrb[0].mxu0
        %815 = vmatprep.mubr.f32.mxu0 0.0
        %816 = vmatmul.mubr.f32.gmra.mrb[0].mxu0 %v726
        %v817 = vpop.f32.mrb[0].mxu0
        %v818 = vadd.f32 0.0, %v817
        %v819 = vpop.f32.mrb[0].mxu0
        %820 = vmatprep.mubr.f32.mxu0 0.0
        %821 = vmatmul.mubr.f32.gmra.mrb[0].mxu0 %v727
        %v822 = vpop.f32.mrb[0].mxu0
        %v823 = vadd.f32 0.0, %v822
        %v824 = vpop.f32.mrb[0].mxu0
        %825 = vmatprep.mubr.f32.mxu0 0.0
        %826 = vmatmul.mubr.f32.gmra.mrb[0].mxu0 %v728
        %v827 = vpop.f32.mrb[0].mxu0
        %v828 = vpop.f32.mrb[0].mxu0
        %829 = vdwg.mxu0
        %v830 = vadd.f32 %v722, %v813
        %v831 = vadd.f32 %v723, %v818
        %v832 = vadd.f32 %v724, %v823
        %v833 = vld [vmem:[#allocation2 + $0x6] sm:$0xff]
        %v834 = vld [vmem:[#allocation2 + $0xe] sm:$0xff]
        %v835 = vld [vmem:[#allocation2 + $0x16] sm:$0xff]
        %v836 = vld [vmem:[#allocation2 + $0x1e] sm:$0xf]
        %s837 = scalar_lea.vmem [#allocation6], 768
        %v838 = vld [vmem:[%s837] sm:$0xff]
        %v839 = vld [vmem:[%s837 + $0x8] sm:$0xff]
        %v840 = vld [vmem:[%s837 + $0x10] sm:$0xff]
        %v841 = vld [vmem:[%s837 + $0x18] sm:$0xff]
        %v842 = vld [vmem:[%s837 + $0x20] sm:$0xff]
        %v843 = vld [vmem:[%s837 + $0x28] sm:$0xff]
        %v844 = vld [vmem:[%s837 + $0x30] sm:$0xff]
        %v845 = vld [vmem:[%s837 + $0x38] sm:$0xff]
        %v846 = vld [vmem:[%s837 + $0x40] sm:$0xff]
        %v847 = vld [vmem:[%s837 + $0x48] sm:$0xff]
        %v848 = vld [vmem:[%s837 + $0x50] sm:$0xff]
        %v849 = vld [vmem:[%s837 + $0x58] sm:$0xff]
        %v850 = vld [vmem:[%s837 + $0x60] sm:$0xff]
        %v851 = vld [vmem:[%s837 + $0x68] sm:$0xff]
        %v852 = vld [vmem:[%s837 + $0x70] sm:$0xff]
        %v853 = vld [vmem:[%s837 + $0x78] sm:$0xff]
        %854 = vmatprep.subr.mxu0 0.0
        %855 = vmatpush1.msra.mxu0 %v838
        %856 = vmatprep.subr.mxu0 0.0
        %857 = vmatpush1.msra.mxu0 %v839
        %858 = vmatprep.subr.mxu0 0.0
        %859 = vmatpush1.msra.mxu0 %v840
        %860 = vmatprep.subr.mxu0 0.0
        %861 = vmatpush1.msra.mxu0 %v841
        %862 = vmatprep.subr.mxu0 0.0
        %863 = vmatpush1.msra.mxu0 %v842
        %864 = vmatprep.subr.mxu0 0.0
        %865 = vmatpush1.msra.mxu0 %v843
        %866 = vmatprep.subr.mxu0 0.0
        %867 = vmatpush1.msra.mxu0 %v844
        %868 = vmatprep.subr.mxu0 0.0
        %869 = vmatpush1.msra.mxu0 %v845
        %870 = vmatprep.subr.mxu0 0.0
        %871 = vmatpush1.msra.mxu0 %v846
        %872 = vmatprep.subr.mxu0 0.0
        %873 = vmatpush1.msra.mxu0 %v847
        %874 = vmatprep.subr.mxu0 0.0
        %875 = vmatpush1.msra.mxu0 %v848
        %876 = vmatprep.subr.mxu0 0.0
        %877 = vmatpush1.msra.mxu0 %v849
        %878 = vmatprep.subr.mxu0 0.0
        %879 = vmatpush1.msra.mxu0 %v850
        %880 = vmatprep.subr.mxu0 0.0
        %881 = vmatpush1.msra.mxu0 %v851
        %882 = vmatprep.subr.mxu0 0.0
        %883 = vmatpush1.msra.mxu0 %v852
        %884 = vmatprep.subr.mxu0 0.0
        %885 = vmatpush1.msra.mxu0 %v853
        %886 = vmatprep.subr.mxu0 0.0
        %887 = vmatpush1.msra.mxu0 0.0
        %888 = vmatprep.subr.mxu0 0.0
        %889 = vmatpush1.msra.mxu0 0.0
        %890 = vmatprep.subr.mxu0 0.0
        %891 = vmatpush1.msra.mxu0 0.0
        %892 = vmatprep.subr.mxu0 0.0
        %893 = vmatpush1.msra.mxu0 0.0
        %894 = vmatprep.subr.mxu0 0.0
        %895 = vmatpush1.msra.mxu0 0.0
        %896 = vmatprep.subr.mxu0 0.0
        %897 = vmatpush1.msra.mxu0 0.0
        %898 = vmatprep.subr.mxu0 0.0
        %899 = vmatpush1.msra.mxu0 0.0
        %900 = vmatprep.subr.mxu0 0.0
        %901 = vmatpush1.msra.mxu0 0.0
        %902 = vmatprep.subr.mxu0 0.0
        %903 = vmatpush1.msra.mxu0 0.0
        %904 = vmatprep.subr.mxu0 0.0
        %905 = vmatpush1.msra.mxu0 0.0
        %906 = vmatprep.subr.mxu0 0.0
        %907 = vmatpush1.msra.mxu0 0.0
        %908 = vmatprep.subr.mxu0 0.0
        %909 = vmatpush1.msra.mxu0 0.0
        %910 = vmatprep.subr.mxu0 0.0
        %911 = vmatpush1.msra.mxu0 0.0
        %912 = vmatprep.subr.mxu0 0.0
        %913 = vmatpush1.msra.mxu0 0.0
        %914 = vmatprep.subr.mxu0 0.0
        %915 = vmatpush1.msra.mxu0 0.0
        %916 = vmatprep.subr.mxu0 0.0
        %917 = vmatpush1.msra.mxu0 0.0
        %918 = vmatprep.mubr.f32.mxu0 0.0
        %919 = vmatmul.mubr.f32.gmra.mrb[0].mxu0 %v833
        %v920 = vpop.f32.mrb[0].mxu0
        %v921 = vadd.f32 0.0, %v920
        %v922 = vpop.f32.mrb[0].mxu0
        %923 = vmatprep.mubr.f32.mxu0 0.0
        %924 = vmatmul.mubr.f32.gmra.mrb[0].mxu0 %v834
        %v925 = vpop.f32.mrb[0].mxu0
        %v926 = vadd.f32 0.0, %v925
        %v927 = vpop.f32.mrb[0].mxu0
        %928 = vmatprep.mubr.f32.mxu0 0.0
        %929 = vmatmul.mubr.f32.gmra.mrb[0].mxu0 %v835
        %v930 = vpop.f32.mrb[0].mxu0
        %v931 = vadd.f32 0.0, %v930
        %v932 = vpop.f32.mrb[0].mxu0
        %933 = vmatprep.mubr.f32.mxu0 0.0
        %934 = vmatmul.mubr.f32.gmra.mrb[0].mxu0 %v836
        %v935 = vpop.f32.mrb[0].mxu0
        %v936 = vpop.f32.mrb[0].mxu0
        %937 = vdwg.mxu0
        %v938 = vadd.f32 %v830, %v921
        %v939 = vadd.f32 %v831, %v926
        %v940 = vadd.f32 %v832, %v931
        %v941 = vld [vmem:[#allocation2 + $0x7] sm:$0xff]
        %v942 = vld [vmem:[#allocation2 + $0xf] sm:$0xff]
        %v943 = vld [vmem:[#allocation2 + $0x17] sm:$0xff]
        %v944 = vld [vmem:[#allocation2 + $0x1f] sm:$0xf]
        %s945 = scalar_lea.vmem [#allocation6], 896
        %v946 = vld [vmem:[%s945] sm:$0xff]
        %v947 = vld [vmem:[%s945 + $0x8] sm:$0xff]
        %v948 = vld [vmem:[%s945 + $0x10] sm:$0xff]
        %v949 = vld [vmem:[%s945 + $0x18] sm:$0xff]
        %v950 = vld [vmem:[%s945 + $0x20] sm:$0xff]
        %v951 = vld [vmem:[%s945 + $0x28] sm:$0xff]
        %v952 = vld [vmem:[%s945 + $0x30] sm:$0xff]
        %v953 = vld [vmem:[%s945 + $0x38] sm:$0xff]
        %v954 = vld [vmem:[%s945 + $0x40] sm:$0xff]
        %v955 = vld [vmem:[%s945 + $0x48] sm:$0xff]
        %v956 = vld [vmem:[%s945 + $0x50] sm:$0xff]
        %v957 = vld [vmem:[%s945 + $0x58] sm:$0xff]
        %v958 = vld [vmem:[%s945 + $0x60] sm:$0xff]
        %v959 = vld [vmem:[%s945 + $0x68] sm:$0xff]
        %v960 = vld [vmem:[%s945 + $0x70] sm:$0xff]
        %v961 = vld [vmem:[%s945 + $0x78] sm:$0xff]
        %962 = vmatprep.subr.mxu0 0.0
        %963 = vmatpush1.msra.mxu0 %v946
        %964 = vmatprep.subr.mxu0 0.0
        %965 = vmatpush1.msra.mxu0 %v947
        %966 = vmatprep.subr.mxu0 0.0
        %967 = vmatpush1.msra.mxu0 %v948
        %968 = vmatprep.subr.mxu0 0.0
        %969 = vmatpush1.msra.mxu0 %v949
        %970 = vmatprep.subr.mxu0 0.0
        %971 = vmatpush1.msra.mxu0 %v950
        %972 = vmatprep.subr.mxu0 0.0
        %973 = vmatpush1.msra.mxu0 %v951
        %974 = vmatprep.subr.mxu0 0.0
        %975 = vmatpush1.msra.mxu0 %v952
        %976 = vmatprep.subr.mxu0 0.0
        %977 = vmatpush1.msra.mxu0 %v953
        %978 = vmatprep.subr.mxu0 0.0
        %979 = vmatpush1.msra.mxu0 %v954
        %980 = vmatprep.subr.mxu0 0.0
        %981 = vmatpush1.msra.mxu0 %v955
        %982 = vmatprep.subr.mxu0 0.0
        %983 = vmatpush1.msra.mxu0 %v956
        %984 = vmatprep.subr.mxu0 0.0
        %985 = vmatpush1.msra.mxu0 %v957
        %986 = vmatprep.subr.mxu0 0.0
        %987 = vmatpush1.msra.mxu0 %v958
        %988 = vmatprep.subr.mxu0 0.0
        %989 = vmatpush1.msra.mxu0 %v959
        %990 = vmatprep.subr.mxu0 0.0
        %991 = vmatpush1.msra.mxu0 %v960
        %992 = vmatprep.subr.mxu0 0.0
        %993 = vmatpush1.msra.mxu0 %v961
        %994 = vmatprep.subr.mxu0 0.0
        %995 = vmatpush1.msra.mxu0 0.0
        %996 = vmatprep.subr.mxu0 0.0
        %997 = vmatpush1.msra.mxu0 0.0
        %998 = vmatprep.subr.mxu0 0.0
        %999 = vmatpush1.msra.mxu0 0.0
        %1000 = vmatprep.subr.mxu0 0.0
        %1001 = vmatpush1.msra.mxu0 0.0
        %1002 = vmatprep.subr.mxu0 0.0
        %1003 = vmatpush1.msra.mxu0 0.0
        %1004 = vmatprep.subr.mxu0 0.0
        %1005 = vmatpush1.msra.mxu0 0.0
        %1006 = vmatprep.subr.mxu0 0.0
        %1007 = vmatpush1.msra.mxu0 0.0
        %1008 = vmatprep.subr.mxu0 0.0
        %1009 = vmatpush1.msra.mxu0 0.0
        %1010 = vmatprep.subr.mxu0 0.0
        %1011 = vmatpush1.msra.mxu0 0.0
        %1012 = vmatprep.subr.mxu0 0.0
        %1013 = vmatpush1.msra.mxu0 0.0
        %1014 = vmatprep.subr.mxu0 0.0
        %1015 = vmatpush1.msra.mxu0 0.0
        %1016 = vmatprep.subr.mxu0 0.0
        %1017 = vmatpush1.msra.mxu0 0.0
        %1018 = vmatprep.subr.mxu0 0.0
        %1019 = vmatpush1.msra.mxu0 0.0
        %1020 = vmatprep.subr.mxu0 0.0
        %1021 = vmatpush1.msra.mxu0 0.0
        %1022 = vmatprep.subr.mxu0 0.0
        %1023 = vmatpush1.msra.mxu0 0.0
        %1024 = vmatprep.subr.mxu0 0.0
        %1025 = vmatpush1.msra.mxu0 0.0
        %1026 = vmatprep.mubr.f32.mxu0 0.0
        %1027 = vmatmul.mubr.f32.gmra.mrb[0].mxu0 %v941
        %v1028 = vpop.f32.mrb[0].mxu0
        %v1029 = vadd.f32 0.0, %v1028
        %v1030 = vpop.f32.mrb[0].mxu0
        %1031 = vmatprep.mubr.f32.mxu0 0.0
        %1032 = vmatmul.mubr.f32.gmra.mrb[0].mxu0 %v942
        %v1033 = vpop.f32.mrb[0].mxu0
        %v1034 = vadd.f32 0.0, %v1033
        %v1035 = vpop.f32.mrb[0].mxu0
        %1036 = vmatprep.mubr.f32.mxu0 0.0
        %1037 = vmatmul.mubr.f32.gmra.mrb[0].mxu0 %v943
        %v1038 = vpop.f32.mrb[0].mxu0
        %v1039 = vadd.f32 0.0, %v1038
        %v1040 = vpop.f32.mrb[0].mxu0
        %1041 = vmatprep.mubr.f32.mxu0 0.0
        %1042 = vmatmul.mubr.f32.gmra.mrb[0].mxu0 %v944
        %v1043 = vpop.f32.mrb[0].mxu0
        %v1044 = vpop.f32.mrb[0].mxu0
        %1045 = vdwg.mxu0
        %v1046 = vadd.f32 %v938, %v1029
        %v1047 = vadd.f32 %v939, %v1034
        %v1048 = vadd.f32 %v940, %v1039
        %v1049 = vld [vmem:[#allocation2 + $0x8] sm:$0xff]
        %v1050 = vld [vmem:[#allocation2 + $0x10] sm:$0xff]
        %v1051 = vld [vmem:[#allocation2 + $0x18] sm:$0xff]
        %v1052 = vld [vmem:[#allocation2 + $0x20] sm:$0xf]
        %s1053 = scalar_lea.vmem [#allocation6], 1024
        %v1054 = vld [vmem:[%s1053] sm:$0xff]
        %v1055 = vld [vmem:[%s1053 + $0x8] sm:$0xff]
        %v1056 = vld [vmem:[%s1053 + $0x10] sm:$0xff]
        %v1057 = vld [vmem:[%s1053 + $0x18] sm:$0xff]
        %v1058 = vld [vmem:[%s1053 + $0x20] sm:$0xff]
        %v1059 = vld [vmem:[%s1053 + $0x28] sm:$0xff]
        %v1060 = vld [vmem:[%s1053 + $0x30] sm:$0xff]
        %v1061 = vld [vmem:[%s1053 + $0x38] sm:$0xff]
        %v1062 = vld [vmem:[%s1053 + $0x40] sm:$0xff]
        %v1063 = vld [vmem:[%s1053 + $0x48] sm:$0xff]
        %v1064 = vld [vmem:[%s1053 + $0x50] sm:$0xff]
        %v1065 = vld [vmem:[%s1053 + $0x58] sm:$0xff]
        %v1066 = vld [vmem:[%s1053 + $0x60] sm:$0xff]
        %v1067 = vld [vmem:[%s1053 + $0x68] sm:$0xff]
        %v1068 = vld [vmem:[%s1053 + $0x70] sm:$0xff]
        %v1069 = vld [vmem:[%s1053 + $0x78] sm:$0xff]
        %1070 = vmatprep.subr.mxu0 0.0
        %1071 = vmatpush1.msra.mxu0 %v1054
        %1072 = vmatprep.subr.mxu0 0.0
        %1073 = vmatpush1.msra.mxu0 %v1055
        %1074 = vmatprep.subr.mxu0 0.0
        %1075 = vmatpush1.msra.mxu0 %v1056
        %1076 = vmatprep.subr.mxu0 0.0
        %1077 = vmatpush1.msra.mxu0 %v1057
        %1078 = vmatprep.subr.mxu0 0.0
        %1079 = vmatpush1.msra.mxu0 %v1058
        %1080 = vmatprep.subr.mxu0 0.0
        %1081 = vmatpush1.msra.mxu0 %v1059
        %1082 = vmatprep.subr.mxu0 0.0
        %1083 = vmatpush1.msra.mxu0 %v1060
        %1084 = vmatprep.subr.mxu0 0.0
        %1085 = vmatpush1.msra.mxu0 %v1061
        %1086 = vmatprep.subr.mxu0 0.0
        %1087 = vmatpush1.msra.mxu0 %v1062
        %1088 = vmatprep.subr.mxu0 0.0
        %1089 = vmatpush1.msra.mxu0 %v1063
        %1090 = vmatprep.subr.mxu0 0.0
        %1091 = vmatpush1.msra.mxu0 %v1064
        %1092 = vmatprep.subr.mxu0 0.0
        %1093 = vmatpush1.msra.mxu0 %v1065
        %1094 = vmatprep.subr.mxu0 0.0
        %1095 = vmatpush1.msra.mxu0 %v1066
        %1096 = vmatprep.subr.mxu0 0.0
        %1097 = vmatpush1.msra.mxu0 %v1067
        %1098 = vmatprep.subr.mxu0 0.0
        %1099 = vmatpush1.msra.mxu0 %v1068
        %1100 = vmatprep.subr.mxu0 0.0
        %1101 = vmatpush1.msra.mxu0 %v1069
        %1102 = vmatprep.subr.mxu0 0.0
        %1103 = vmatpush1.msra.mxu0 0.0
        %1104 = vmatprep.subr.mxu0 0.0
        %1105 = vmatpush1.msra.mxu0 0.0
        %1106 = vmatprep.subr.mxu0 0.0
        %1107 = vmatpush1.msra.mxu0 0.0
        %1108 = vmatprep.subr.mxu0 0.0
        %1109 = vmatpush1.msra.mxu0 0.0
        %1110 = vmatprep.subr.mxu0 0.0
        %1111 = vmatpush1.msra.mxu0 0.0
        %1112 = vmatprep.subr.mxu0 0.0
        %1113 = vmatpush1.msra.mxu0 0.0
        %1114 = vmatprep.subr.mxu0 0.0
        %1115 = vmatpush1.msra.mxu0 0.0
        %1116 = vmatprep.subr.mxu0 0.0
        %1117 = vmatpush1.msra.mxu0 0.0
        %1118 = vmatprep.subr.mxu0 0.0
        %1119 = vmatpush1.msra.mxu0 0.0
        %1120 = vmatprep.subr.mxu0 0.0
        %1121 = vmatpush1.msra.mxu0 0.0
        %1122 = vmatprep.subr.mxu0 0.0
        %1123 = vmatpush1.msra.mxu0 0.0
        %1124 = vmatprep.subr.mxu0 0.0
        %1125 = vmatpush1.msra.mxu0 0.0
        %1126 = vmatprep.subr.mxu0 0.0
        %1127 = vmatpush1.msra.mxu0 0.0
        %1128 = vmatprep.subr.mxu0 0.0
        %1129 = vmatpush1.msra.mxu0 0.0
        %1130 = vmatprep.subr.mxu0 0.0
        %1131 = vmatpush1.msra.mxu0 0.0
        %1132 = vmatprep.subr.mxu0 0.0
        %1133 = vmatpush1.msra.mxu0 0.0
        %1134 = vmatprep.mubr.f32.mxu0 0.0
        %1135 = vmatmul.mubr.f32.gmra.mrb[0].mxu0 %v1049
        %v1136 = vpop.f32.mrb[0].mxu0
        %v1137 = vadd.f32 0.0, %v1136
        %v1138 = vpop.f32.mrb[0].mxu0
        %1139 = vmatprep.mubr.f32.mxu0 0.0
        %1140 = vmatmul.mubr.f32.gmra.mrb[0].mxu0 %v1050
        %v1141 = vpop.f32.mrb[0].mxu0
        %v1142 = vadd.f32 0.0, %v1141
        %v1143 = vpop.f32.mrb[0].mxu0
        %1144 = vmatprep.mubr.f32.mxu0 0.0
        %1145 = vmatmul.mubr.f32.gmra.mrb[0].mxu0 %v1051
        %v1146 = vpop.f32.mrb[0].mxu0
        %v1147 = vadd.f32 0.0, %v1146
        %v1148 = vpop.f32.mrb[0].mxu0
        %1149 = vmatprep.mubr.f32.mxu0 0.0
        %1150 = vmatmul.mubr.f32.gmra.mrb[0].mxu0 %v1052
        %v1151 = vpop.f32.mrb[0].mxu0
        %v1152 = vpop.f32.mrb[0].mxu0
        %1153 = vdwg.mxu0
        %v1154 = vadd.f32 %v1046, %v1137
        %v1155 = vadd.f32 %v1047, %v1142
        %v1156 = vadd.f32 %v1048, %v1147
        %v1157 = vld [vmem:[#allocation2 + $0x9] sm:$0xff]
        %v1158 = vld [vmem:[#allocation2 + $0x11] sm:$0xff]
        %v1159 = vld [vmem:[#allocation2 + $0x19] sm:$0xff]
        %v1160 = vld [vmem:[#allocation2 + $0x21] sm:$0xf]
        %s1161 = scalar_lea.vmem [#allocation6], 1152
        %v1162 = vld [vmem:[%s1161] sm:$0xff]
        %v1163 = vld [vmem:[%s1161 + $0x8] sm:$0xff]
        %v1164 = vld [vmem:[%s1161 + $0x10] sm:$0xff]
        %v1165 = vld [vmem:[%s1161 + $0x18] sm:$0xff]
        %v1166 = vld [vmem:[%s1161 + $0x20] sm:$0xff]
        %v1167 = vld [vmem:[%s1161 + $0x28] sm:$0xff]
        %v1168 = vld [vmem:[%s1161 + $0x30] sm:$0xff]
        %v1169 = vld [vmem:[%s1161 + $0x38] sm:$0xff]
        %v1170 = vld [vmem:[%s1161 + $0x40] sm:$0xff]
        %v1171 = vld [vmem:[%s1161 + $0x48] sm:$0xff]
        %v1172 = vld [vmem:[%s1161 + $0x50] sm:$0xff]
        %v1173 = vld [vmem:[%s1161 + $0x58] sm:$0xff]
        %v1174 = vld [vmem:[%s1161 + $0x60] sm:$0xff]
        %v1175 = vld [vmem:[%s1161 + $0x68] sm:$0xff]
        %v1176 = vld [vmem:[%s1161 + $0x70] sm:$0xff]
        %v1177 = vld [vmem:[%s1161 + $0x78] sm:$0xff]
        %1178 = vmatprep.subr.mxu0 0.0
        %1179 = vmatpush1.msra.mxu0 %v1162
        %1180 = vmatprep.subr.mxu0 0.0
        %1181 = vmatpush1.msra.mxu0 %v1163
        %1182 = vmatprep.subr.mxu0 0.0
        %1183 = vmatpush1.msra.mxu0 %v1164
        %1184 = vmatprep.subr.mxu0 0.0
        %1185 = vmatpush1.msra.mxu0 %v1165
        %1186 = vmatprep.subr.mxu0 0.0
        %1187 = vmatpush1.msra.mxu0 %v1166
        %1188 = vmatprep.subr.mxu0 0.0
        %1189 = vmatpush1.msra.mxu0 %v1167
        %1190 = vmatprep.subr.mxu0 0.0
        %1191 = vmatpush1.msra.mxu0 %v1168
        %1192 = vmatprep.subr.mxu0 0.0
        %1193 = vmatpush1.msra.mxu0 %v1169
        %1194 = vmatprep.subr.mxu0 0.0
        %1195 = vmatpush1.msra.mxu0 %v1170
        %1196 = vmatprep.subr.mxu0 0.0
        %1197 = vmatpush1.msra.mxu0 %v1171
        %1198 = vmatprep.subr.mxu0 0.0
        %1199 = vmatpush1.msra.mxu0 %v1172
        %1200 = vmatprep.subr.mxu0 0.0
        %1201 = vmatpush1.msra.mxu0 %v1173
        %1202 = vmatprep.subr.mxu0 0.0
        %1203 = vmatpush1.msra.mxu0 %v1174
        %1204 = vmatprep.subr.mxu0 0.0
        %1205 = vmatpush1.msra.mxu0 %v1175
        %1206 = vmatprep.subr.mxu0 0.0
        %1207 = vmatpush1.msra.mxu0 %v1176
        %1208 = vmatprep.subr.mxu0 0.0
        %1209 = vmatpush1.msra.mxu0 %v1177
        %1210 = vmatprep.subr.mxu0 0.0
        %1211 = vmatpush1.msra.mxu0 0.0
        %1212 = vmatprep.subr.mxu0 0.0
        %1213 = vmatpush1.msra.mxu0 0.0
        %1214 = vmatprep.subr.mxu0 0.0
        %1215 = vmatpush1.msra.mxu0 0.0
        %1216 = vmatprep.subr.mxu0 0.0
        %1217 = vmatpush1.msra.mxu0 0.0
        %1218 = vmatprep.subr.mxu0 0.0
        %1219 = vmatpush1.msra.mxu0 0.0
        %1220 = vmatprep.subr.mxu0 0.0
        %1221 = vmatpush1.msra.mxu0 0.0
        %1222 = vmatprep.subr.mxu0 0.0
        %1223 = vmatpush1.msra.mxu0 0.0
        %1224 = vmatprep.subr.mxu0 0.0
        %1225 = vmatpush1.msra.mxu0 0.0
        %1226 = vmatprep.subr.mxu0 0.0
        %1227 = vmatpush1.msra.mxu0 0.0
        %1228 = vmatprep.subr.mxu0 0.0
        %1229 = vmatpush1.msra.mxu0 0.0
        %1230 = vmatprep.subr.mxu0 0.0
        %1231 = vmatpush1.msra.mxu0 0.0
        %1232 = vmatprep.subr.mxu0 0.0
        %1233 = vmatpush1.msra.mxu0 0.0
        %1234 = vmatprep.subr.mxu0 0.0
        %1235 = vmatpush1.msra.mxu0 0.0
        %1236 = vmatprep.subr.mxu0 0.0
        %1237 = vmatpush1.msra.mxu0 0.0
        %1238 = vmatprep.subr.mxu0 0.0
        %1239 = vmatpush1.msra.mxu0 0.0
        %1240 = vmatprep.subr.mxu0 0.0
        %1241 = vmatpush1.msra.mxu0 0.0
        %1242 = vmatprep.mubr.f32.mxu0 0.0
        %1243 = vmatmul.mubr.f32.gmra.mrb[0].mxu0 %v1157
        %v1244 = vpop.f32.mrb[0].mxu0
        %v1245 = vadd.f32 0.0, %v1244
        %v1246 = vpop.f32.mrb[0].mxu0
        %1247 = vmatprep.mubr.f32.mxu0 0.0
        %1248 = vmatmul.mubr.f32.gmra.mrb[0].mxu0 %v1158
        %v1249 = vpop.f32.mrb[0].mxu0
        %v1250 = vadd.f32 0.0, %v1249
        %v1251 = vpop.f32.mrb[0].mxu0
        %1252 = vmatprep.mubr.f32.mxu0 0.0
        %1253 = vmatmul.mubr.f32.gmra.mrb[0].mxu0 %v1159
        %v1254 = vpop.f32.mrb[0].mxu0
        %v1255 = vadd.f32 0.0, %v1254
        %v1256 = vpop.f32.mrb[0].mxu0
        %1257 = vmatprep.mubr.f32.mxu0 0.0
        %1258 = vmatmul.mubr.f32.gmra.mrb[0].mxu0 %v1160
        %v1259 = vpop.f32.mrb[0].mxu0
        %v1260 = vpop.f32.mrb[0].mxu0
        %1261 = vdwg.mxu0
        %v1262 = vadd.f32 %v1154, %v1245
        %v1263 = vadd.f32 %v1155, %v1250
        %v1264 = vadd.f32 %v1156, %v1255
        %v1265 = vld [vmem:[#allocation2 + $0xa] sm:$0xff]
        %v1266 = vld [vmem:[#allocation2 + $0x12] sm:$0xff]
        %v1267 = vld [vmem:[#allocation2 + $0x1a] sm:$0xff]
        %v1268 = vld [vmem:[#allocation2 + $0x22] sm:$0xf]
        %s1269 = scalar_lea.vmem [#allocation6], 1280
        %v1270 = vld [vmem:[%s1269] sm:$0xff]
        %v1271 = vld [vmem:[%s1269 + $0x8] sm:$0xff]
        %v1272 = vld [vmem:[%s1269 + $0x10] sm:$0xff]
        %v1273 = vld [vmem:[%s1269 + $0x18] sm:$0xff]
        %v1274 = vld [vmem:[%s1269 + $0x20] sm:$0xff]
        %v1275 = vld [vmem:[%s1269 + $0x28] sm:$0xff]
        %v1276 = vld [vmem:[%s1269 + $0x30] sm:$0xff]
        %v1277 = vld [vmem:[%s1269 + $0x38] sm:$0xff]
        %v1278 = vld [vmem:[%s1269 + $0x40] sm:$0xff]
        %v1279 = vld [vmem:[%s1269 + $0x48] sm:$0xff]
        %v1280 = vld [vmem:[%s1269 + $0x50] sm:$0xff]
        %v1281 = vld [vmem:[%s1269 + $0x58] sm:$0xff]
        %v1282 = vld [vmem:[%s1269 + $0x60] sm:$0xff]
        %v1283 = vld [vmem:[%s1269 + $0x68] sm:$0xff]
        %v1284 = vld [vmem:[%s1269 + $0x70] sm:$0xff]
        %v1285 = vld [vmem:[%s1269 + $0x78] sm:$0xff]
        %1286 = vmatprep.subr.mxu0 0.0
        %1287 = vmatpush1.msra.mxu0 %v1270
        %1288 = vmatprep.subr.mxu0 0.0
        %1289 = vmatpush1.msra.mxu0 %v1271
        %1290 = vmatprep.subr.mxu0 0.0
        %1291 = vmatpush1.msra.mxu0 %v1272
        %1292 = vmatprep.subr.mxu0 0.0
        %1293 = vmatpush1.msra.mxu0 %v1273
        %1294 = vmatprep.subr.mxu0 0.0
        %1295 = vmatpush1.msra.mxu0 %v1274
        %1296 = vmatprep.subr.mxu0 0.0
        %1297 = vmatpush1.msra.mxu0 %v1275
        %1298 = vmatprep.subr.mxu0 0.0
        %1299 = vmatpush1.msra.mxu0 %v1276
        %1300 = vmatprep.subr.mxu0 0.0
        %1301 = vmatpush1.msra.mxu0 %v1277
        %1302 = vmatprep.subr.mxu0 0.0
        %1303 = vmatpush1.msra.mxu0 %v1278
        %1304 = vmatprep.subr.mxu0 0.0
        %1305 = vmatpush1.msra.mxu0 %v1279
        %1306 = vmatprep.subr.mxu0 0.0
        %1307 = vmatpush1.msra.mxu0 %v1280
        %1308 = vmatprep.subr.mxu0 0.0
        %1309 = vmatpush1.msra.mxu0 %v1281
        %1310 = vmatprep.subr.mxu0 0.0
        %1311 = vmatpush1.msra.mxu0 %v1282
        %1312 = vmatprep.subr.mxu0 0.0
        %1313 = vmatpush1.msra.mxu0 %v1283
        %1314 = vmatprep.subr.mxu0 0.0
        %1315 = vmatpush1.msra.mxu0 %v1284
        %1316 = vmatprep.subr.mxu0 0.0
        %1317 = vmatpush1.msra.mxu0 %v1285
        %1318 = vmatprep.subr.mxu0 0.0
        %1319 = vmatpush1.msra.mxu0 0.0
        %1320 = vmatprep.subr.mxu0 0.0
        %1321 = vmatpush1.msra.mxu0 0.0
        %1322 = vmatprep.subr.mxu0 0.0
        %1323 = vmatpush1.msra.mxu0 0.0
        %1324 = vmatprep.subr.mxu0 0.0
        %1325 = vmatpush1.msra.mxu0 0.0
        %1326 = vmatprep.subr.mxu0 0.0
        %1327 = vmatpush1.msra.mxu0 0.0
        %1328 = vmatprep.subr.mxu0 0.0
        %1329 = vmatpush1.msra.mxu0 0.0
        %1330 = vmatprep.subr.mxu0 0.0
        %1331 = vmatpush1.msra.mxu0 0.0
        %1332 = vmatprep.subr.mxu0 0.0
        %1333 = vmatpush1.msra.mxu0 0.0
        %1334 = vmatprep.subr.mxu0 0.0
        %1335 = vmatpush1.msra.mxu0 0.0
        %1336 = vmatprep.subr.mxu0 0.0
        %1337 = vmatpush1.msra.mxu0 0.0
        %1338 = vmatprep.subr.mxu0 0.0
        %1339 = vmatpush1.msra.mxu0 0.0
        %1340 = vmatprep.subr.mxu0 0.0
        %1341 = vmatpush1.msra.mxu0 0.0
        %1342 = vmatprep.subr.mxu0 0.0
        %1343 = vmatpush1.msra.mxu0 0.0
        %1344 = vmatprep.subr.mxu0 0.0
        %1345 = vmatpush1.msra.mxu0 0.0
        %1346 = vmatprep.subr.mxu0 0.0
        %1347 = vmatpush1.msra.mxu0 0.0
        %1348 = vmatprep.subr.mxu0 0.0
        %1349 = vmatpush1.msra.mxu0 0.0
        %1350 = vmatprep.mubr.f32.mxu0 0.0
        %1351 = vmatmul.mubr.f32.gmra.mrb[0].mxu0 %v1265
        %v1352 = vpop.f32.mrb[0].mxu0
        %v1353 = vadd.f32 0.0, %v1352
        %v1354 = vpop.f32.mrb[0].mxu0
        %1355 = vmatprep.mubr.f32.mxu0 0.0
        %1356 = vmatmul.mubr.f32.gmra.mrb[0].mxu0 %v1266
        %v1357 = vpop.f32.mrb[0].mxu0
        %v1358 = vadd.f32 0.0, %v1357
        %v1359 = vpop.f32.mrb[0].mxu0
        %1360 = vmatprep.mubr.f32.mxu0 0.0
        %1361 = vmatmul.mubr.f32.gmra.mrb[0].mxu0 %v1267
        %v1362 = vpop.f32.mrb[0].mxu0
        %v1363 = vadd.f32 0.0, %v1362
        %v1364 = vpop.f32.mrb[0].mxu0
        %1365 = vmatprep.mubr.f32.mxu0 0.0
        %1366 = vmatmul.mubr.f32.gmra.mrb[0].mxu0 %v1268
        %v1367 = vpop.f32.mrb[0].mxu0
        %v1368 = vpop.f32.mrb[0].mxu0
        %1369 = vdwg.mxu0
        %v1370 = vadd.f32 %v1262, %v1353
        %v1371 = vadd.f32 %v1263, %v1358
        %v1372 = vadd.f32 %v1264, %v1363
        %v1373 = vld [vmem:[#allocation2 + $0xb] sm:$0xff]
        %v1374 = vld [vmem:[#allocation2 + $0x13] sm:$0xff]
        %v1375 = vld [vmem:[#allocation2 + $0x1b] sm:$0xff]
        %v1376 = vld [vmem:[#allocation2 + $0x23] sm:$0xf]
        %s1377 = scalar_lea.vmem [#allocation6], 1408
        %v1378 = vld [vmem:[%s1377] sm:$0xff]
        %v1379 = vld [vmem:[%s1377 + $0x8] sm:$0xff]
        %v1380 = vld [vmem:[%s1377 + $0x10] sm:$0xff]
        %v1381 = vld [vmem:[%s1377 + $0x18] sm:$0xff]
        %v1382 = vld [vmem:[%s1377 + $0x20] sm:$0xff]
        %v1383 = vld [vmem:[%s1377 + $0x28] sm:$0xff]
        %v1384 = vld [vmem:[%s1377 + $0x30] sm:$0xff]
        %v1385 = vld [vmem:[%s1377 + $0x38] sm:$0xff]
        %v1386 = vld [vmem:[%s1377 + $0x40] sm:$0xff]
        %v1387 = vld [vmem:[%s1377 + $0x48] sm:$0xff]
        %v1388 = vld [vmem:[%s1377 + $0x50] sm:$0xff]
        %v1389 = vld [vmem:[%s1377 + $0x58] sm:$0xff]
        %v1390 = vld [vmem:[%s1377 + $0x60] sm:$0xff]
        %v1391 = vld [vmem:[%s1377 + $0x68] sm:$0xff]
        %v1392 = vld [vmem:[%s1377 + $0x70] sm:$0xff]
        %v1393 = vld [vmem:[%s1377 + $0x78] sm:$0xff]
        %1394 = vmatprep.subr.mxu0 0.0
        %1395 = vmatpush1.msra.mxu0 %v1378
        %1396 = vmatprep.subr.mxu0 0.0
        %1397 = vmatpush1.msra.mxu0 %v1379
        %1398 = vmatprep.subr.mxu0 0.0
        %1399 = vmatpush1.msra.mxu0 %v1380
        %1400 = vmatprep.subr.mxu0 0.0
        %1401 = vmatpush1.msra.mxu0 %v1381
        %1402 = vmatprep.subr.mxu0 0.0
        %1403 = vmatpush1.msra.mxu0 %v1382
        %1404 = vmatprep.subr.mxu0 0.0
        %1405 = vmatpush1.msra.mxu0 %v1383
        %1406 = vmatprep.subr.mxu0 0.0
        %1407 = vmatpush1.msra.mxu0 %v1384
        %1408 = vmatprep.subr.mxu0 0.0
        %1409 = vmatpush1.msra.mxu0 %v1385
        %1410 = vmatprep.subr.mxu0 0.0
        %1411 = vmatpush1.msra.mxu0 %v1386
        %1412 = vmatprep.subr.mxu0 0.0
        %1413 = vmatpush1.msra.mxu0 %v1387
        %1414 = vmatprep.subr.mxu0 0.0
        %1415 = vmatpush1.msra.mxu0 %v1388
        %1416 = vmatprep.subr.mxu0 0.0
        %1417 = vmatpush1.msra.mxu0 %v1389
        %1418 = vmatprep.subr.mxu0 0.0
        %1419 = vmatpush1.msra.mxu0 %v1390
        %1420 = vmatprep.subr.mxu0 0.0
        %1421 = vmatpush1.msra.mxu0 %v1391
        %1422 = vmatprep.subr.mxu0 0.0
        %1423 = vmatpush1.msra.mxu0 %v1392
        %1424 = vmatprep.subr.mxu0 0.0
        %1425 = vmatpush1.msra.mxu0 %v1393
        %1426 = vmatprep.subr.mxu0 0.0
        %1427 = vmatpush1.msra.mxu0 0.0
        %1428 = vmatprep.subr.mxu0 0.0
        %1429 = vmatpush1.msra.mxu0 0.0
        %1430 = vmatprep.subr.mxu0 0.0
        %1431 = vmatpush1.msra.mxu0 0.0
        %1432 = vmatprep.subr.mxu0 0.0
        %1433 = vmatpush1.msra.mxu0 0.0
        %1434 = vmatprep.subr.mxu0 0.0
        %1435 = vmatpush1.msra.mxu0 0.0
        %1436 = vmatprep.subr.mxu0 0.0
        %1437 = vmatpush1.msra.mxu0 0.0
        %1438 = vmatprep.subr.mxu0 0.0
        %1439 = vmatpush1.msra.mxu0 0.0
        %1440 = vmatprep.subr.mxu0 0.0
        %1441 = vmatpush1.msra.mxu0 0.0
        %1442 = vmatprep.subr.mxu0 0.0
        %1443 = vmatpush1.msra.mxu0 0.0
        %1444 = vmatprep.subr.mxu0 0.0
        %1445 = vmatpush1.msra.mxu0 0.0
        %1446 = vmatprep.subr.mxu0 0.0
        %1447 = vmatpush1.msra.mxu0 0.0
        %1448 = vmatprep.subr.mxu0 0.0
        %1449 = vmatpush1.msra.mxu0 0.0
        %1450 = vmatprep.subr.mxu0 0.0
        %1451 = vmatpush1.msra.mxu0 0.0
        %1452 = vmatprep.subr.mxu0 0.0
        %1453 = vmatpush1.msra.mxu0 0.0
        %1454 = vmatprep.subr.mxu0 0.0
        %1455 = vmatpush1.msra.mxu0 0.0
        %1456 = vmatprep.subr.mxu0 0.0
        %1457 = vmatpush1.msra.mxu0 0.0
        %1458 = vmatprep.mubr.f32.mxu0 0.0
        %1459 = vmatmul.mubr.f32.gmra.mrb[0].mxu0 %v1373
        %v1460 = vpop.f32.mrb[0].mxu0
        %v1461 = vadd.f32 0.0, %v1460
        %v1462 = vpop.f32.mrb[0].mxu0
        %1463 = vmatprep.mubr.f32.mxu0 0.0
        %1464 = vmatmul.mubr.f32.gmra.mrb[0].mxu0 %v1374
        %v1465 = vpop.f32.mrb[0].mxu0
        %v1466 = vadd.f32 0.0, %v1465
        %v1467 = vpop.f32.mrb[0].mxu0
        %1468 = vmatprep.mubr.f32.mxu0 0.0
        %1469 = vmatmul.mubr.f32.gmra.mrb[0].mxu0 %v1375
        %v1470 = vpop.f32.mrb[0].mxu0
        %v1471 = vadd.f32 0.0, %v1470
        %v1472 = vpop.f32.mrb[0].mxu0
        %1473 = vmatprep.mubr.f32.mxu0 0.0
        %1474 = vmatmul.mubr.f32.gmra.mrb[0].mxu0 %v1376
        %v1475 = vpop.f32.mrb[0].mxu0
        %v1476 = vpop.f32.mrb[0].mxu0
        %1477 = vdwg.mxu0
        %v1478 = vadd.f32 %v1370, %v1461
        %v1479 = vadd.f32 %v1371, %v1466
        %v1480 = vadd.f32 %v1372, %v1471
        %v1481 = vld [vmem:[#allocation2 + $0xc] sm:$0xff]
        %v1482 = vld [vmem:[#allocation2 + $0x14] sm:$0xff]
        %v1483 = vld [vmem:[#allocation2 + $0x1c] sm:$0xff]
        %v1484 = vld [vmem:[#allocation2 + $0x24] sm:$0xf]
        %s1485 = scalar_lea.vmem [#allocation6], 1536
        %v1486 = vld [vmem:[%s1485] sm:$0xff]
        %v1487 = vld [vmem:[%s1485 + $0x8] sm:$0xff]
        %v1488 = vld [vmem:[%s1485 + $0x10] sm:$0xff]
        %v1489 = vld [vmem:[%s1485 + $0x18] sm:$0xff]
        %v1490 = vld [vmem:[%s1485 + $0x20] sm:$0xff]
        %v1491 = vld [vmem:[%s1485 + $0x28] sm:$0xff]
        %v1492 = vld [vmem:[%s1485 + $0x30] sm:$0xff]
        %v1493 = vld [vmem:[%s1485 + $0x38] sm:$0xff]
        %v1494 = vld [vmem:[%s1485 + $0x40] sm:$0xff]
        %v1495 = vld [vmem:[%s1485 + $0x48] sm:$0xff]
        %v1496 = vld [vmem:[%s1485 + $0x50] sm:$0xff]
        %v1497 = vld [vmem:[%s1485 + $0x58] sm:$0xff]
        %v1498 = vld [vmem:[%s1485 + $0x60] sm:$0xff]
        %v1499 = vld [vmem:[%s1485 + $0x68] sm:$0xff]
        %v1500 = vld [vmem:[%s1485 + $0x70] sm:$0xff]
        %v1501 = vld [vmem:[%s1485 + $0x78] sm:$0xff]
        %1502 = vmatprep.subr.mxu0 0.0
        %1503 = vmatpush1.msra.mxu0 %v1486
        %1504 = vmatprep.subr.mxu0 0.0
        %1505 = vmatpush1.msra.mxu0 %v1487
        %1506 = vmatprep.subr.mxu0 0.0
        %1507 = vmatpush1.msra.mxu0 %v1488
        %1508 = vmatprep.subr.mxu0 0.0
        %1509 = vmatpush1.msra.mxu0 %v1489
        %1510 = vmatprep.subr.mxu0 0.0
        %1511 = vmatpush1.msra.mxu0 %v1490
        %1512 = vmatprep.subr.mxu0 0.0
        %1513 = vmatpush1.msra.mxu0 %v1491
        %1514 = vmatprep.subr.mxu0 0.0
        %1515 = vmatpush1.msra.mxu0 %v1492
        %1516 = vmatprep.subr.mxu0 0.0
        %1517 = vmatpush1.msra.mxu0 %v1493
        %1518 = vmatprep.subr.mxu0 0.0
        %1519 = vmatpush1.msra.mxu0 %v1494
        %1520 = vmatprep.subr.mxu0 0.0
        %1521 = vmatpush1.msra.mxu0 %v1495
        %1522 = vmatprep.subr.mxu0 0.0
        %1523 = vmatpush1.msra.mxu0 %v1496
        %1524 = vmatprep.subr.mxu0 0.0
        %1525 = vmatpush1.msra.mxu0 %v1497
        %1526 = vmatprep.subr.mxu0 0.0
        %1527 = vmatpush1.msra.mxu0 %v1498
        %1528 = vmatprep.subr.mxu0 0.0
        %1529 = vmatpush1.msra.mxu0 %v1499
        %1530 = vmatprep.subr.mxu0 0.0
        %1531 = vmatpush1.msra.mxu0 %v1500
        %1532 = vmatprep.subr.mxu0 0.0
        %1533 = vmatpush1.msra.mxu0 %v1501
        %1534 = vmatprep.subr.mxu0 0.0
        %1535 = vmatpush1.msra.mxu0 0.0
        %1536 = vmatprep.subr.mxu0 0.0
        %1537 = vmatpush1.msra.mxu0 0.0
        %1538 = vmatprep.subr.mxu0 0.0
        %1539 = vmatpush1.msra.mxu0 0.0
        %1540 = vmatprep.subr.mxu0 0.0
        %1541 = vmatpush1.msra.mxu0 0.0
        %1542 = vmatprep.subr.mxu0 0.0
        %1543 = vmatpush1.msra.mxu0 0.0
        %1544 = vmatprep.subr.mxu0 0.0
        %1545 = vmatpush1.msra.mxu0 0.0
        %1546 = vmatprep.subr.mxu0 0.0
        %1547 = vmatpush1.msra.mxu0 0.0
        %1548 = vmatprep.subr.mxu0 0.0
        %1549 = vmatpush1.msra.mxu0 0.0
        %1550 = vmatprep.subr.mxu0 0.0
        %1551 = vmatpush1.msra.mxu0 0.0
        %1552 = vmatprep.subr.mxu0 0.0
        %1553 = vmatpush1.msra.mxu0 0.0
        %1554 = vmatprep.subr.mxu0 0.0
        %1555 = vmatpush1.msra.mxu0 0.0
        %1556 = vmatprep.subr.mxu0 0.0
        %1557 = vmatpush1.msra.mxu0 0.0
        %1558 = vmatprep.subr.mxu0 0.0
        %1559 = vmatpush1.msra.mxu0 0.0
        %1560 = vmatprep.subr.mxu0 0.0
        %1561 = vmatpush1.msra.mxu0 0.0
        %1562 = vmatprep.subr.mxu0 0.0
        %1563 = vmatpush1.msra.mxu0 0.0
        %1564 = vmatprep.subr.mxu0 0.0
        %1565 = vmatpush1.msra.mxu0 0.0
        %1566 = vmatprep.mubr.f32.mxu0 0.0
        %1567 = vmatmul.mubr.f32.gmra.mrb[0].mxu0 %v1481
        %v1568 = vpop.f32.mrb[0].mxu0
        %v1569 = vadd.f32 0.0, %v1568
        %v1570 = vpop.f32.mrb[0].mxu0
        %1571 = vmatprep.mubr.f32.mxu0 0.0
        %1572 = vmatmul.mubr.f32.gmra.mrb[0].mxu0 %v1482
        %v1573 = vpop.f32.mrb[0].mxu0
        %v1574 = vadd.f32 0.0, %v1573
        %v1575 = vpop.f32.mrb[0].mxu0
        %1576 = vmatprep.mubr.f32.mxu0 0.0
        %1577 = vmatmul.mubr.f32.gmra.mrb[0].mxu0 %v1483
        %v1578 = vpop.f32.mrb[0].mxu0
        %v1579 = vadd.f32 0.0, %v1578
        %v1580 = vpop.f32.mrb[0].mxu0
        %1581 = vmatprep.mubr.f32.mxu0 0.0
        %1582 = vmatmul.mubr.f32.gmra.mrb[0].mxu0 %v1484
        %v1583 = vpop.f32.mrb[0].mxu0
        %v1584 = vpop.f32.mrb[0].mxu0
        %1585 = vdwg.mxu0
        %v1586 = vadd.f32 %v1478, %v1569
        %v1587 = vadd.f32 %v1479, %v1574
        %v1588 = vadd.f32 %v1480, %v1579
        %v1589 = vsub.f32 %v1586, 0.5
        %v1590 = vsub.f32 %v1587, 0.5
        %v1591 = vsub.f32 %v1588, 0.5
        %v1592 = vmul.f32 %v1589, %v1589
        %v1593 = vmul.f32 %v1590, %v1590
        %v1594 = vmul.f32 %v1591, %v1591
        %v1595 = vmul.f32 %v1592, -10.0
        %v1596 = vmul.f32 %v1593, -10.0
        %v1597 = vmul.f32 %v1594, -10.0
        %v1598 = vmul.f32 %v1595, 1.442695
        %v1599 = vpow.pop %v1598
        %v1600 = vmul.f32 %v1596, 1.442695
        %v1601 = vpow.pop %v1600
        %v1602 = vmul.f32 %v1597, 1.442695
        %v1603 = vpow.pop %v1602
        %v1604 = vsub.f32 %v1599, 0.5
        %v1605 = vsub.f32 %v1601, 0.5
        %v1606 = vsub.f32 %v1603, 0.5
        %v1607 = vmul.f32 %v1604, 0.1
        %v1608 = vmul.f32 %v1605, 0.1
        %v1609 = vmul.f32 %v1606, 0.1
        %v1610 = vadd.f32 %v833, %v1607
        %v1611 = vadd.f32 %v834, %v1608
        %v1612 = vadd.f32 %v835, %v1609
        %v1613 = vmax.f32 %v1610, 0.0
        %v1614 = vmax.f32 %v1611, 0.0
        %v1615 = vmax.f32 %v1612, 0.0
        %v1616 = vmin.f32 %v1613, 1.0
        %v1617 = vmin.f32 %v1614, 1.0
        %v1618 = vmin.f32 %v1615, 1.0
        %1619 = vst [vmem:[%s176 - $0x6] sm:$0xc0] %v1616
        %1620 = vst [vmem:[%s176 + $0x2] sm:$0xff] %v1617
        %1621 = vst [vmem:[%s176 + $0xa] sm:$0x3f] %v1618
        %s1622 = sand.u32 %s75, 1
        %s1623 = scalar_lea.sflag [#allocation5], %s1622
        %s1624 = sand.u32 %s75, 1
        %s1625 = smul.addr %s1624, 16
        %s1626 = scalar_lea.vmem [#allocation8], %s1625
        // Predicated region
        $region37: #{tpu_custom_call.1} parent=27 // pred_check
          %p1627 = pneg %p85
        $region38: #{tpu_custom_call.1} parent=27 // pred_check_branch
          %1629 = sbr.rel (%p1627) target = $region40
        $region39: #{tpu_custom_call.1} parent=27 // pred_region
          %s1631 = ssub.s32 256, 256
          %1632 = vsyncadd %s1623, %s1631
          %s1633 = smul.addr %s20, 2
          %s1634 = smul.addr %s1633, 128
          %s1635 = scalar_lea.hbm %s2, %s1634
          %s1636 = sshll.u32 %s1626, 4
          %s1637 = int_to_ptr.vmem [resolvable:$true] %s1636
          %1642 = dma.vmem_to_hbm [thread:$0]  %s1637, 256, %s1635, %s1623, 128, 128, 8
        $region40: #{tpu_custom_call.1} parent=27 // pred_fallthru
          _
      $region28: #{tpu_custom_call.1} parent=5 // pred_fallthru
        _
      %p1643 = scmp.le.s32.totalorder 2, %s15
      // Predicated region
      $region41: #{tpu_custom_call.1} parent=5 // pred_check
        %p1644 = pneg %p1643
      $region42: #{tpu_custom_call.1} parent=5 // pred_check_branch
        %1646 = sbr.rel (%p1644) target = $region44
      $region43: #{tpu_custom_call.1} parent=5 // pred_region
        %s1647 = ssub.s32 %s15, 2
        // Predicated region
        $region45: #{tpu_custom_call.1} parent=43 // pred_check
          %p1648 = pneg %p91
        $region46: #{tpu_custom_call.1} parent=43 // pred_check_branch
          %1650 = sbr.rel (%p1648) target = $region48
        $region47: #{tpu_custom_call.1} parent=43 // pred_region
          %s1651 = sand.u32 %s76, 1
          %s1652 = scalar_lea.sflag [#allocation5], %s1651
          %s1653 = sand.u32 %s76, 1
          %s1654 = smul.addr %s1653, 16
          %s1655 = scalar_lea.vmem [#allocation8], %s1654
          %1656 = dma.done %s1652, 256
        $region48: #{tpu_custom_call.1} parent=43 // pred_fallthru
          _
      $region44: #{tpu_custom_call.1} parent=5 // pred_fallthru
        _
    $region6: #{tpu_custom_call.1} parent=1 // loop_footer
      %s19 = sadd.s32 1, %s15
    $region7: #{tpu_custom_call.1} parent=1 // loop_footer_branch
      %14 = sbr.rel target = $region3
    $region8: #{tpu_custom_call.1} parent=1 // loop_exit
      _
    %1657 = vsyncpa [#allocation4], 1
    %s1658 = scalar_lea.sflag [#allocation4], 1
    %1659 = vsyncpa %s1658, 1
    %1660 = vsyncpa [#allocation7], 1
    %1661 = vsyncpa [#allocation5], 1
    %s1662 = scalar_lea.sflag [#allocation5], 1
    %1663 = vsyncpa %s1662, 1

</llo_original>
